<compile_context>
chip_gen: v7x
topology: tpu7x:2x2x1
jax: 0.10.0
libtpu: 0.0.40
codegen_flags: <defaults>
</compile_context>

<pallas_src>
import functools

import jax
import jax.numpy as jnp
from jax.experimental import pallas as pl
from jax.experimental.pallas import tpu as pltpu


def _round_up(x, m):
    return ((x + m - 1) // m) * m


def _pick_tk(seq_len, max_tk=16):
    """Largest divisor of seq_len that is <= max_tk (timesteps per grid step)."""
    for cand in range(min(seq_len, max_tk), 0, -1):
        if seq_len % cand == 0:
            return cand
    return 1


def _lstm_kernel(gx_ref, whh_ref, out_ref, c_out_ref, h_scr, c_scr):
    """One grid step == TK timesteps of the LSTM recurrence.

    gx_ref  : (TK, Bp, 4*Hp) f32  precomputed x_t @ W_ih^T + bias
    whh_ref : (Hp, 4*Hp)    bf16  W_hh^T (resident across the whole grid)
    out_ref : (TK, Bp, Hp)        h_t for the TK timesteps of this block
    c_out_ref : (Bp, Hp)          final cell state (written on last block)
    h_scr, c_scr : (Bp, Hp) f32   recurrent carry across grid steps
    """
    t = pl.program_id(0)
    tk = gx_ref.shape[0]
    hp = h_scr.shape[-1]

    @pl.when(t == 0)
    def _init():
        h_scr[...] = jnp.zeros_like(h_scr)
        c_scr[...] = jnp.zeros_like(c_scr)

    def step(k, carry):
        h, c = carry  # f32 (Bp, Hp)
        # Only the recurrent matmul is left on the serial path; bf16 operands,
        # f32 accumulation.
        gates = gx_ref[k] + jnp.dot(h.astype(whh_ref.dtype), whh_ref[...],
                                    preferred_element_type=jnp.float32)
        # PyTorch LSTM gate order: input, forget, cell(g), output.
        # Slices are 128-lane aligned because hp % 128 == 0.
        i_g = jax.nn.sigmoid(gates[:, 0 * hp:1 * hp])
        f_g = jax.nn.sigmoid(gates[:, 1 * hp:2 * hp])
        g_g = jnp.tanh(gates[:, 2 * hp:3 * hp])
        o_g = jax.nn.sigmoid(gates[:, 3 * hp:4 * hp])
        c_new = f_g * c + i_g * g_g
        h_new = o_g * jnp.tanh(c_new)
        out_ref[k] = h_new.astype(out_ref.dtype)   # dense, lane-aligned store
        return h_new, c_new

    h0 = h_scr[...]
    c0 = c_scr[...]
    h_f, c_f = jax.lax.fori_loop(0, tk, step, (h0, c0), unroll=True)

    h_scr[...] = h_f
    c_scr[...] = c_f

    @pl.when(t == pl.num_programs(0) - 1)
    def _finalize():
        c_out_ref[...] = c_f.astype(c_out_ref.dtype)


@jax.jit
def rnn_encoder_forward(data, w_ih, w_hh, b_ih, b_hh):
    """Forward of RNNEncoder (lstm, 1 layer, unidirectional, no mask).

    data : (batch, seq, input_size) float32
    w_ih : (4*hidden, input_size)
    w_hh : (4*hidden, hidden)
    b_ih, b_hh : (4*hidden,)

    Returns (output, (h_n, c_n)) with
      output : (batch, seq, hidden)
      h_n, c_n : (1, batch, hidden)
    """
    B, S, I = data.shape
    H4 = w_ih.shape[0]
    H = H4 // 4

    Hp = _round_up(max(H, 1), 128)        # lane-aligned hidden size
    Bp = _round_up(max(B, 1), 8)          # sublane-aligned batch
    TK = _pick_tk(S)                      # timesteps per grid step
    n_blocks = S // TK

    # --- Padded / per-gate-blocked weights ------------------------------
    wih_t = jnp.transpose(w_ih, (1, 0)).reshape(I, 4, H)     # (I, 4, H)
    whh_t = jnp.transpose(w_hh, (1, 0)).reshape(H, 4, H)     # (H, 4, H)
    bias = (b_ih + b_hh).reshape(4, H)

    wih_p = (jnp.zeros((I, 4, Hp), jnp.float32)
             .at[:, :, :H].set(wih_t.astype(jnp.float32))
             .reshape(I, 4 * Hp))
    whh_p = (jnp.zeros((Hp, 4, Hp), jnp.float32)
             .at[:H, :, :H].set(whh_t.astype(jnp.float32))
             .reshape(Hp, 4 * Hp)
             .astype(jnp.bfloat16))                          # bf16 resident weight
    bias_p = (jnp.zeros((4, Hp), jnp.float32)
              .at[:, :H].set(bias.astype(jnp.float32))
              .reshape(4 * Hp))

    data_p = jnp.zeros((Bp, S, I), data.dtype).at[:B].set(data)

    # --- Hoisted input projection (one big matmul, M = S*Bp), fused with
    # the batch-major -> time-major transpose. ---------------------------
    gates_x = jnp.einsum('bsi,ig->sbg', data_p.astype(jnp.float32), wih_p)
    gates_x = gates_x + bias_p                               # (S, Bp, 4*Hp) f32

    out_shapes = (
        jax.ShapeDtypeStruct((S, Bp, Hp), data.dtype),       # per-step h (time-major)
        jax.ShapeDtypeStruct((Bp, Hp), data.dtype),          # c_n
    )

    grid_spec = pltpu.PrefetchScalarGridSpec(
        num_scalar_prefetch=0,
        grid=(n_blocks,),
        in_specs=[
            pl.BlockSpec((TK, Bp, 4 * Hp), lambda t: (t, 0, 0)),  # gate pre-acts
            pl.BlockSpec((Hp, 4 * Hp), lambda t: (0, 0)),         # W_hh^T (resident)
        ],
        out_specs=[
            pl.BlockSpec((TK, Bp, Hp), lambda t: (t, 0, 0)),      # output block
            pl.BlockSpec((Bp, Hp), lambda t: (0, 0)),             # c_n (resident)
        ],
        scratch_shapes=[
            pltpu.VMEM((Bp, Hp), jnp.float32),                    # h carry
            pltpu.VMEM((Bp, Hp), jnp.float32),                    # c carry
        ],
    )

    cost = pl.CostEstimate(
        flops=2 * S * Bp * Hp * (4 * Hp),
        transcendentals=5 * S * Bp * Hp,
        bytes_accessed=(S * Bp * 4 * Hp * 4        # gates_x
                        + Hp * 4 * Hp * 2          # bf16 W_hh^T
                        + S * Bp * Hp * 4          # output
                        + Bp * Hp * 4),            # c_n
    )

    out_t, c_last = pl.pallas_call(
        _lstm_kernel,
        out_shape=out_shapes,
        grid_spec=grid_spec,
        compiler_params=pltpu.CompilerParams(
            # the time axis is a sequential recurrence
            dimension_semantics=("arbitrary",),
            # NOTE: for very large H on v7x (64 MiB VMEM) raise
            # vmem_limit_bytes explicitly; defaults are ample for the
            # bf16 weight + blocked-input footprint at these shapes.
        ),
        cost_estimate=cost,
    )(gates_x, whh_p)

    # output.transpose(0, 1).contiguous(), with padding sliced off.
    output = jnp.transpose(out_t[:, :B, :H], (1, 0, 2))      # (B, S, H)
    h_n = output[:, -1, :][None, :, :]                       # (1, B, H)
    c_n = c_last[:B, :H][None, :, :]                         # (1, B, H)
    return output, (h_n, c_n)


def _lstm_reference(data, w_ih, w_hh, b_ih, b_hh):
    """Pure-JAX f32 reference (lax.scan) with identical semantics."""
    B, S, I = data.shape
    H = w_hh.shape[1]
    data_t = jnp.transpose(data, (1, 0, 2))

    def step(carry, x_t):
        h, c = carry
        gates = x_t @ w_ih.T + h @ w_hh.T + b_ih + b_hh
        i_g = jax.nn.sigmoid(gates[:, 0 * H:1 * H])
        f_g = jax.nn.sigmoid(gates[:, 1 * H:2 * H])
        g_g = jnp.tanh(gates[:, 2 * H:3 * H])
        o_g = jax.nn.sigmoid(gates[:, 3 * H:4 * H])
        c_new = f_g * c + i_g * g_g
        h_new = o_g * jnp.tanh(c_new)
        return (h_new, c_new), h_new

    init = (jnp.zeros((B, H), data.dtype), jnp.zeros((B, H), data.dtype))
    (h_n, c_n), out_t = jax.lax.scan(step, init, data_t)
    return jnp.transpose(out_t, (1, 0, 2)), (h_n[None], c_n[None])


if __name__ == "__main__":
    # Small shapes: batch=2, seq=8, input_size=16, hidden_size=32
    B, S, I, H = 2, 8, 16, 32

    key = jax.random.PRNGKey(0)
    k_data, k_wih, k_whh, k_bih, k_bhh = jax.random.split(key, 5)

    # Deterministic parameter init, PyTorch-style uniform(-1/sqrt(H), 1/sqrt(H))
    bound = 1.0 / jnp.sqrt(jnp.float32(H))
    w_ih = jax.random.uniform(k_wih, (4 * H, I), jnp.float32, -bound, bound)
    w_hh = jax.random.uniform(k_whh, (4 * H, H), jnp.float32, -bound, bound)
    b_ih = jax.random.uniform(k_bih, (4 * H,), jnp.float32, -bound, bound)
    b_hh = jax.random.uniform(k_bhh, (4 * H,), jnp.float32, -bound, bound)

    data = jax.random.normal(k_data, (B, S, I), jnp.float32)

    out, (h_n, c_n) = rnn_encoder_forward(data, w_ih, w_hh, b_ih, b_hh)
    out = jax.block_until_ready(out)
    h_n = jax.block_until_ready(h_n)
    c_n = jax.block_until_ready(c_n)

    # Sanity check against a pure-JAX f32 reference.  The recurrent matmul
    # uses bf16 operands (f32 accumulation / carry), so use a bf16-level
    # tolerance.
    ref_out, (ref_h, ref_c) = _lstm_reference(data, w_ih, w_hh, b_ih, b_hh)
    assert out.shape == (B, S, H)
    assert h_n.shape == (1, B, H) and c_n.shape == (1, B, H)
    assert jnp.allclose(out, ref_out, atol=3e-2, rtol=3e-2)
    assert jnp.allclose(h_n, ref_h, atol=3e-2, rtol=3e-2)
    assert jnp.allclose(c_n, ref_c, atol=3e-2, rtol=3e-2)

    print("KERNEL_OK")
</pallas_src>

<mosaic_0001>
module attributes {stable_mosaic.version = 11 : i64} {
  func.func @_lstm_kernel(%arg0: i32, %arg1: memref<8x8x512xf32, #tpu.memory_space<vmem>>, %arg2: memref<128x512xbf16, #tpu.memory_space<vmem>>, %arg3: memref<8x8x128xf32, #tpu.memory_space<vmem>>, %arg4: memref<8x128xf32, #tpu.memory_space<vmem>>, %arg5: memref<8x128xf32, #tpu.memory_space<vmem>>, %arg6: memref<8x128xf32, #tpu.memory_space<vmem>>) attributes {dimension_semantics = [#tpu.dimension_semantics<arbitrary>], iteration_bounds = array<i64: 1>, scalar_prefetch = 0 : i64, scratch_operands = 2 : i64, tpu.core_type = #tpu.core_type<tc>, window_params = [{transform_indices = @transform_0, window_bounds = array<i64: 8, 8, 512>}, {pipeline_mode = #tpu.pipeline_mode<synchronous>, transform_indices = @transform_1, window_bounds = array<i64: 128, 512>}, {transform_indices = @transform_2, window_bounds = array<i64: 8, 8, 128>}, {pipeline_mode = #tpu.pipeline_mode<synchronous>, transform_indices = @transform_3, window_bounds = array<i64: 8, 128>}]} {
    %c0_i32 = arith.constant 0 : i32
    %0 = arith.cmpi eq, %arg0, %c0_i32 : i32
    %1 = arith.extui %0 : i1 to i32
    %c0_i32_0 = arith.constant 0 : i32
    %2 = arith.cmpi ne, %1, %c0_i32_0 : i32
    scf.if %2 {
      %cst_90 = arith.constant 0.000000e+00 : f32
      %298 = vector.broadcast %cst_90 : f32 to vector<8x128xf32>
      %c0_91 = arith.constant 0 : index
      %c0_92 = arith.constant 0 : index
      %299 = vector.load %arg5[%c0_91, %c0_92] : memref<8x128xf32, #tpu.memory_space<vmem>>, vector<8x128xf32>
      tpu.vector_store %arg5[%c0_91, %c0_92], %298 {strides = array<i32>} : memref<8x128xf32, #tpu.memory_space<vmem>>, vector<8x128xf32>,
      %cst_93 = arith.constant 0.000000e+00 : f32
      %300 = vector.broadcast %cst_93 : f32 to vector<8x128xf32>
      %c0_94 = arith.constant 0 : index
      %c0_95 = arith.constant 0 : index
      %301 = vector.load %arg6[%c0_94, %c0_95] : memref<8x128xf32, #tpu.memory_space<vmem>>, vector<8x128xf32>
      tpu.vector_store %arg6[%c0_94, %c0_95], %300 {strides = array<i32>} : memref<8x128xf32, #tpu.memory_space<vmem>>, vector<8x128xf32>,
    } else {
    }
    %c0 = arith.constant 0 : index
    %c0_1 = arith.constant 0 : index
    %3 = vector.load %arg5[%c0, %c0_1] : memref<8x128xf32, #tpu.memory_space<vmem>>, vector<8x128xf32>
    %c0_2 = arith.constant 0 : index
    %c0_3 = arith.constant 0 : index
    %4 = vector.load %arg6[%c0_2, %c0_3] : memref<8x128xf32, #tpu.memory_space<vmem>>, vector<8x128xf32>
    %c0_i32_4 = arith.constant 0 : i32
    %5 = arith.index_cast %c0_i32_4 : i32 to index
    %c0_5 = arith.constant 0 : index
    %c0_6 = arith.constant 0 : index
    %6 = vector.load %arg1[%5, %c0_5, %c0_6] : memref<8x8x512xf32, #tpu.memory_space<vmem>>, vector<1x8x512xf32>
    %7 = vector.shape_cast %6 : vector<1x8x512xf32> to vector<8x512xf32>
    %8 = arith.truncf %3 : vector<8x128xf32> to vector<8x128xbf16>
    %c0_7 = arith.constant 0 : index
    %c0_8 = arith.constant 0 : index
    %9 = vector.load %arg2[%c0_7, %c0_8] : memref<128x512xbf16, #tpu.memory_space<vmem>>, vector<128x512xbf16>
    %cst = arith.constant dense<0.000000e+00> : vector<8x512xf32>
    %10 = tpu.matmul %8, %9, %cst {dimension_numbers = #tpu.dot_dimension_numbers<[1], [0], [0], [1], [0, 0, 1, 1], [], []>} : vector<8x128xbf16>, vector<128x512xbf16>, vector<8x512xf32> -> vector<8x512xf32>
    %11 = arith.addf %7, %10 : vector<8x512xf32>
    %12 = vector.extract_strided_slice %11 {offsets = [0, 0], sizes = [8, 128], strides = [1, 1]} : vector<8x512xf32> to vector<8x128xf32>
    %13 = arith.negf %12 : vector<8x128xf32>
    %14 = math.exp %13 : vector<8x128xf32>
    %cst_9 = arith.constant 1.000000e+00 : f32
    %15 = vector.broadcast %cst_9 : f32 to vector<8x128xf32>
    %16 = arith.addf %15, %14 : vector<8x128xf32>
    %17 = arith.divf %15, %16 : vector<8x128xf32>
    %18 = vector.extract_strided_slice %11 {offsets = [0, 128], sizes = [8, 128], strides = [1, 1]} : vector<8x512xf32> to vector<8x128xf32>
    %19 = arith.negf %18 : vector<8x128xf32>
    %20 = math.exp %19 : vector<8x128xf32>
    %cst_10 = arith.constant 1.000000e+00 : f32
    %21 = vector.broadcast %cst_10 : f32 to vector<8x128xf32>
    %22 = arith.addf %21, %20 : vector<8x128xf32>
    %23 = arith.divf %21, %22 : vector<8x128xf32>
    %24 = vector.extract_strided_slice %11 {offsets = [0, 256], sizes = [8, 128], strides = [1, 1]} : vector<8x512xf32> to vector<8x128xf32>
    %25 = math.tanh %24 : vector<8x128xf32>
    %26 = vector.extract_strided_slice %11 {offsets = [0, 384], sizes = [8, 128], strides = [1, 1]} : vector<8x512xf32> to vector<8x128xf32>
    %27 = arith.negf %26 : vector<8x128xf32>
    %28 = math.exp %27 : vector<8x128xf32>
    %cst_11 = arith.constant 1.000000e+00 : f32
    %29 = vector.broadcast %cst_11 : f32 to vector<8x128xf32>
    %30 = arith.addf %29, %28 : vector<8x128xf32>
    %31 = arith.divf %29, %30 : vector<8x128xf32>
    %32 = arith.mulf %23, %4 : vector<8x128xf32>
    %33 = arith.mulf %17, %25 : vector<8x128xf32>
    %34 = arith.addf %32, %33 : vector<8x128xf32>
    %35 = math.tanh %34 : vector<8x128xf32>
    %36 = arith.mulf %31, %35 : vector<8x128xf32>
    %37 = arith.index_cast %c0_i32_4 : i32 to index
    %c0_12 = arith.constant 0 : index
    %c0_13 = arith.constant 0 : index
    %38 = vector.load %arg3[%37, %c0_12, %c0_13] : memref<8x8x128xf32, #tpu.memory_space<vmem>>, vector<1x8x128xf32>
    %39 = vector.shape_cast %38 : vector<1x8x128xf32> to vector<8x128xf32>
    %40 = vector.shape_cast %36 : vector<8x128xf32> to vector<1x8x128xf32>
    tpu.vector_store %arg3[%37, %c0_12, %c0_13], %40 {strides = array<i32>} : memref<8x8x128xf32, #tpu.memory_space<vmem>>, vector<1x8x128xf32>,
    %c1_i32 = arith.constant 1 : i32
    %41 = arith.index_cast %c1_i32 : i32 to index
    %c0_14 = arith.constant 0 : index
    %c0_15 = arith.constant 0 : index
    %42 = vector.load %arg1[%41, %c0_14, %c0_15] : memref<8x8x512xf32, #tpu.memory_space<vmem>>, vector<1x8x512xf32>
    %43 = vector.shape_cast %42 : vector<1x8x512xf32> to vector<8x512xf32>
    %44 = arith.truncf %36 : vector<8x128xf32> to vector<8x128xbf16>
    %c0_16 = arith.constant 0 : index
    %c0_17 = arith.constant 0 : index
    %45 = vector.load %arg2[%c0_16, %c0_17] : memref<128x512xbf16, #tpu.memory_space<vmem>>, vector<128x512xbf16>
    %cst_18 = arith.constant dense<0.000000e+00> : vector<8x512xf32>
    %46 = tpu.matmul %44, %45, %cst_18 {dimension_numbers = #tpu.dot_dimension_numbers<[1], [0], [0], [1], [0, 0, 1, 1], [], []>} : vector<8x128xbf16>, vector<128x512xbf16>, vector<8x512xf32> -> vector<8x512xf32>
    %47 = arith.addf %43, %46 : vector<8x512xf32>
    %48 = vector.extract_strided_slice %47 {offsets = [0, 0], sizes = [8, 128], strides = [1, 1]} : vector<8x512xf32> to vector<8x128xf32>
    %49 = arith.negf %48 : vector<8x128xf32>
    %50 = math.exp %49 : vector<8x128xf32>
    %cst_19 = arith.constant 1.000000e+00 : f32
    %51 = vector.broadcast %cst_19 : f32 to vector<8x128xf32>
    %52 = arith.addf %51, %50 : vector<8x128xf32>
    %53 = arith.divf %51, %52 : vector<8x128xf32>
    %54 = vector.extract_strided_slice %47 {offsets = [0, 128], sizes = [8, 128], strides = [1, 1]} : vector<8x512xf32> to vector<8x128xf32>
    %55 = arith.negf %54 : vector<8x128xf32>
    %56 = math.exp %55 : vector<8x128xf32>
    %cst_20 = arith.constant 1.000000e+00 : f32
    %57 = vector.broadcast %cst_20 : f32 to vector<8x128xf32>
    %58 = arith.addf %57, %56 : vector<8x128xf32>
    %59 = arith.divf %57, %58 : vector<8x128xf32>
    %60 = vector.extract_strided_slice %47 {offsets = [0, 256], sizes = [8, 128], strides = [1, 1]} : vector<8x512xf32> to vector<8x128xf32>
    %61 = math.tanh %60 : vector<8x128xf32>
    %62 = vector.extract_strided_slice %47 {offsets = [0, 384], sizes = [8, 128], strides = [1, 1]} : vector<8x512xf32> to vector<8x128xf32>
    %63 = arith.negf %62 : vector<8x128xf32>
    %64 = math.exp %63 : vector<8x128xf32>
    %cst_21 = arith.constant 1.000000e+00 : f32
    %65 = vector.broadcast %cst_21 : f32 to vector<8x128xf32>
    %66 = arith.addf %65, %64 : vector<8x128xf32>
    %67 = arith.divf %65, %66 : vector<8x128xf32>
    %68 = arith.mulf %59, %34 : vector<8x128xf32>
    %69 = arith.mulf %53, %61 : vector<8x128xf32>
    %70 = arith.addf %68, %69 : vector<8x128xf32>
    %71 = math.tanh %70 : vector<8x128xf32>
    %72 = arith.mulf %67, %71 : vector<8x128xf32>
    %73 = arith.index_cast %c1_i32 : i32 to index
    %c0_22 = arith.constant 0 : index
    %c0_23 = arith.constant 0 : index
    %74 = vector.load %arg3[%73, %c0_22, %c0_23] : memref<8x8x128xf32, #tpu.memory_space<vmem>>, vector<1x8x128xf32>
    %75 = vector.shape_cast %74 : vector<1x8x128xf32> to vector<8x128xf32>
    %76 = vector.shape_cast %72 : vector<8x128xf32> to vector<1x8x128xf32>
    tpu.vector_store %arg3[%73, %c0_22, %c0_23], %76 {strides = array<i32>} : memref<8x8x128xf32, #tpu.memory_space<vmem>>, vector<1x8x128xf32>,
    %c2_i32 = arith.constant 2 : i32
    %77 = arith.index_cast %c2_i32 : i32 to index
    %c0_24 = arith.constant 0 : index
    %c0_25 = arith.constant 0 : index
    %78 = vector.load %arg1[%77, %c0_24, %c0_25] : memref<8x8x512xf32, #tpu.memory_space<vmem>>, vector<1x8x512xf32>
    %79 = vector.shape_cast %78 : vector<1x8x512xf32> to vector<8x512xf32>
    %80 = arith.truncf %72 : vector<8x128xf32> to vector<8x128xbf16>
    %c0_26 = arith.constant 0 : index
    %c0_27 = arith.constant 0 : index
    %81 = vector.load %arg2[%c0_26, %c0_27] : memref<128x512xbf16, #tpu.memory_space<vmem>>, vector<128x512xbf16>
    %cst_28 = arith.constant dense<0.000000e+00> : vector<8x512xf32>
    %82 = tpu.matmul %80, %81, %cst_28 {dimension_numbers = #tpu.dot_dimension_numbers<[1], [0], [0], [1], [0, 0, 1, 1], [], []>} : vector<8x128xbf16>, vector<128x512xbf16>, vector<8x512xf32> -> vector<8x512xf32>
    %83 = arith.addf %79, %82 : vector<8x512xf32>
    %84 = vector.extract_strided_slice %83 {offsets = [0, 0], sizes = [8, 128], strides = [1, 1]} : vector<8x512xf32> to vector<8x128xf32>
    %85 = arith.negf %84 : vector<8x128xf32>
    %86 = math.exp %85 : vector<8x128xf32>
    %cst_29 = arith.constant 1.000000e+00 : f32
    %87 = vector.broadcast %cst_29 : f32 to vector<8x128xf32>
    %88 = arith.addf %87, %86 : vector<8x128xf32>
    %89 = arith.divf %87, %88 : vector<8x128xf32>
    %90 = vector.extract_strided_slice %83 {offsets = [0, 128], sizes = [8, 128], strides = [1, 1]} : vector<8x512xf32> to vector<8x128xf32>
    %91 = arith.negf %90 : vector<8x128xf32>
    %92 = math.exp %91 : vector<8x128xf32>
    %cst_30 = arith.constant 1.000000e+00 : f32
    %93 = vector.broadcast %cst_30 : f32 to vector<8x128xf32>
    %94 = arith.addf %93, %92 : vector<8x128xf32>
    %95 = arith.divf %93, %94 : vector<8x128xf32>
    %96 = vector.extract_strided_slice %83 {offsets = [0, 256], sizes = [8, 128], strides = [1, 1]} : vector<8x512xf32> to vector<8x128xf32>
    %97 = math.tanh %96 : vector<8x128xf32>
    %98 = vector.extract_strided_slice %83 {offsets = [0, 384], sizes = [8, 128], strides = [1, 1]} : vector<8x512xf32> to vector<8x128xf32>
    %99 = arith.negf %98 : vector<8x128xf32>
    %100 = math.exp %99 : vector<8x128xf32>
    %cst_31 = arith.constant 1.000000e+00 : f32
    %101 = vector.broadcast %cst_31 : f32 to vector<8x128xf32>
    %102 = arith.addf %101, %100 : vector<8x128xf32>
    %103 = arith.divf %101, %102 : vector<8x128xf32>
    %104 = arith.mulf %95, %70 : vector<8x128xf32>
    %105 = arith.mulf %89, %97 : vector<8x128xf32>
    %106 = arith.addf %104, %105 : vector<8x128xf32>
    %107 = math.tanh %106 : vector<8x128xf32>
    %108 = arith.mulf %103, %107 : vector<8x128xf32>
    %109 = arith.index_cast %c2_i32 : i32 to index
    %c0_32 = arith.constant 0 : index
    %c0_33 = arith.constant 0 : index
    %110 = vector.load %arg3[%109, %c0_32, %c0_33] : memref<8x8x128xf32, #tpu.memory_space<vmem>>, vector<1x8x128xf32>
    %111 = vector.shape_cast %110 : vector<1x8x128xf32> to vector<8x128xf32>
    %112 = vector.shape_cast %108 : vector<8x128xf32> to vector<1x8x128xf32>
    tpu.vector_store %arg3[%109, %c0_32, %c0_33], %112 {strides = array<i32>} : memref<8x8x128xf32, #tpu.memory_space<vmem>>, vector<1x8x128xf32>,
    %c3_i32 = arith.constant 3 : i32
    %113 = arith.index_cast %c3_i32 : i32 to index
    %c0_34 = arith.constant 0 : index
    %c0_35 = arith.constant 0 : index
    %114 = vector.load %arg1[%113, %c0_34, %c0_35] : memref<8x8x512xf32, #tpu.memory_space<vmem>>, vector<1x8x512xf32>
    %115 = vector.shape_cast %114 : vector<1x8x512xf32> to vector<8x512xf32>
    %116 = arith.truncf %108 : vector<8x128xf32> to vector<8x128xbf16>
    %c0_36 = arith.constant 0 : index
    %c0_37 = arith.constant 0 : index
    %117 = vector.load %arg2[%c0_36, %c0_37] : memref<128x512xbf16, #tpu.memory_space<vmem>>, vector<128x512xbf16>
    %cst_38 = arith.constant dense<0.000000e+00> : vector<8x512xf32>
    %118 = tpu.matmul %116, %117, %cst_38 {dimension_numbers = #tpu.dot_dimension_numbers<[1], [0], [0], [1], [0, 0, 1, 1], [], []>} : vector<8x128xbf16>, vector<128x512xbf16>, vector<8x512xf32> -> vector<8x512xf32>
    %119 = arith.addf %115, %118 : vector<8x512xf32>
    %120 = vector.extract_strided_slice %119 {offsets = [0, 0], sizes = [8, 128], strides = [1, 1]} : vector<8x512xf32> to vector<8x128xf32>
    %121 = arith.negf %120 : vector<8x128xf32>
    %122 = math.exp %121 : vector<8x128xf32>
    %cst_39 = arith.constant 1.000000e+00 : f32
    %123 = vector.broadcast %cst_39 : f32 to vector<8x128xf32>
    %124 = arith.addf %123, %122 : vector<8x128xf32>
    %125 = arith.divf %123, %124 : vector<8x128xf32>
    %126 = vector.extract_strided_slice %119 {offsets = [0, 128], sizes = [8, 128], strides = [1, 1]} : vector<8x512xf32> to vector<8x128xf32>
    %127 = arith.negf %126 : vector<8x128xf32>
    %128 = math.exp %127 : vector<8x128xf32>
    %cst_40 = arith.constant 1.000000e+00 : f32
    %129 = vector.broadcast %cst_40 : f32 to vector<8x128xf32>
    %130 = arith.addf %129, %128 : vector<8x128xf32>
    %131 = arith.divf %129, %130 : vector<8x128xf32>
    %132 = vector.extract_strided_slice %119 {offsets = [0, 256], sizes = [8, 128], strides = [1, 1]} : vector<8x512xf32> to vector<8x128xf32>
    %133 = math.tanh %132 : vector<8x128xf32>
    %134 = vector.extract_strided_slice %119 {offsets = [0, 384], sizes = [8, 128], strides = [1, 1]} : vector<8x512xf32> to vector<8x128xf32>
    %135 = arith.negf %134 : vector<8x128xf32>
    %136 = math.exp %135 : vector<8x128xf32>
    %cst_41 = arith.constant 1.000000e+00 : f32
    %137 = vector.broadcast %cst_41 : f32 to vector<8x128xf32>
    %138 = arith.addf %137, %136 : vector<8x128xf32>
    %139 = arith.divf %137, %138 : vector<8x128xf32>
    %140 = arith.mulf %131, %106 : vector<8x128xf32>
    %141 = arith.mulf %125, %133 : vector<8x128xf32>
    %142 = arith.addf %140, %141 : vector<8x128xf32>
    %143 = math.tanh %142 : vector<8x128xf32>
    %144 = arith.mulf %139, %143 : vector<8x128xf32>
    %145 = arith.index_cast %c3_i32 : i32 to index
    %c0_42 = arith.constant 0 : index
    %c0_43 = arith.constant 0 : index
    %146 = vector.load %arg3[%145, %c0_42, %c0_43] : memref<8x8x128xf32, #tpu.memory_space<vmem>>, vector<1x8x128xf32>
    %147 = vector.shape_cast %146 : vector<1x8x128xf32> to vector<8x128xf32>
    %148 = vector.shape_cast %144 : vector<8x128xf32> to vector<1x8x128xf32>
    tpu.vector_store %arg3[%145, %c0_42, %c0_43], %148 {strides = array<i32>} : memref<8x8x128xf32, #tpu.memory_space<vmem>>, vector<1x8x128xf32>,
    %c4_i32 = arith.constant 4 : i32
    %149 = arith.index_cast %c4_i32 : i32 to index
    %c0_44 = arith.constant 0 : index
    %c0_45 = arith.constant 0 : index
    %150 = vector.load %arg1[%149, %c0_44, %c0_45] : memref<8x8x512xf32, #tpu.memory_space<vmem>>, vector<1x8x512xf32>
    %151 = vector.shape_cast %150 : vector<1x8x512xf32> to vector<8x512xf32>
    %152 = arith.truncf %144 : vector<8x128xf32> to vector<8x128xbf16>
    %c0_46 = arith.constant 0 : index
    %c0_47 = arith.constant 0 : index
    %153 = vector.load %arg2[%c0_46, %c0_47] : memref<128x512xbf16, #tpu.memory_space<vmem>>, vector<128x512xbf16>
    %cst_48 = arith.constant dense<0.000000e+00> : vector<8x512xf32>
    %154 = tpu.matmul %152, %153, %cst_48 {dimension_numbers = #tpu.dot_dimension_numbers<[1], [0], [0], [1], [0, 0, 1, 1], [], []>} : vector<8x128xbf16>, vector<128x512xbf16>, vector<8x512xf32> -> vector<8x512xf32>
    %155 = arith.addf %151, %154 : vector<8x512xf32>
    %156 = vector.extract_strided_slice %155 {offsets = [0, 0], sizes = [8, 128], strides = [1, 1]} : vector<8x512xf32> to vector<8x128xf32>
    %157 = arith.negf %156 : vector<8x128xf32>
    %158 = math.exp %157 : vector<8x128xf32>
    %cst_49 = arith.constant 1.000000e+00 : f32
    %159 = vector.broadcast %cst_49 : f32 to vector<8x128xf32>
    %160 = arith.addf %159, %158 : vector<8x128xf32>
    %161 = arith.divf %159, %160 : vector<8x128xf32>
    %162 = vector.extract_strided_slice %155 {offsets = [0, 128], sizes = [8, 128], strides = [1, 1]} : vector<8x512xf32> to vector<8x128xf32>
    %163 = arith.negf %162 : vector<8x128xf32>
    %164 = math.exp %163 : vector<8x128xf32>
    %cst_50 = arith.constant 1.000000e+00 : f32
    %165 = vector.broadcast %cst_50 : f32 to vector<8x128xf32>
    %166 = arith.addf %165, %164 : vector<8x128xf32>
    %167 = arith.divf %165, %166 : vector<8x128xf32>
    %168 = vector.extract_strided_slice %155 {offsets = [0, 256], sizes = [8, 128], strides = [1, 1]} : vector<8x512xf32> to vector<8x128xf32>
    %169 = math.tanh %168 : vector<8x128xf32>
    %170 = vector.extract_strided_slice %155 {offsets = [0, 384], sizes = [8, 128], strides = [1, 1]} : vector<8x512xf32> to vector<8x128xf32>
    %171 = arith.negf %170 : vector<8x128xf32>
    %172 = math.exp %171 : vector<8x128xf32>
    %cst_51 = arith.constant 1.000000e+00 : f32
    %173 = vector.broadcast %cst_51 : f32 to vector<8x128xf32>
    %174 = arith.addf %173, %172 : vector<8x128xf32>
    %175 = arith.divf %173, %174 : vector<8x128xf32>
    %176 = arith.mulf %167, %142 : vector<8x128xf32>
    %177 = arith.mulf %161, %169 : vector<8x128xf32>
    %178 = arith.addf %176, %177 : vector<8x128xf32>
    %179 = math.tanh %178 : vector<8x128xf32>
    %180 = arith.mulf %175, %179 : vector<8x128xf32>
    %181 = arith.index_cast %c4_i32 : i32 to index
    %c0_52 = arith.constant 0 : index
    %c0_53 = arith.constant 0 : index
    %182 = vector.load %arg3[%181, %c0_52, %c0_53] : memref<8x8x128xf32, #tpu.memory_space<vmem>>, vector<1x8x128xf32>
    %183 = vector.shape_cast %182 : vector<1x8x128xf32> to vector<8x128xf32>
    %184 = vector.shape_cast %180 : vector<8x128xf32> to vector<1x8x128xf32>
    tpu.vector_store %arg3[%181, %c0_52, %c0_53], %184 {strides = array<i32>} : memref<8x8x128xf32, #tpu.memory_space<vmem>>, vector<1x8x128xf32>,
    %c5_i32 = arith.constant 5 : i32
    %185 = arith.index_cast %c5_i32 : i32 to index
    %c0_54 = arith.constant 0 : index
    %c0_55 = arith.constant 0 : index
    %186 = vector.load %arg1[%185, %c0_54, %c0_55] : memref<8x8x512xf32, #tpu.memory_space<vmem>>, vector<1x8x512xf32>
    %187 = vector.shape_cast %186 : vector<1x8x512xf32> to vector<8x512xf32>
    %188 = arith.truncf %180 : vector<8x128xf32> to vector<8x128xbf16>
    %c0_56 = arith.constant 0 : index
    %c0_57 = arith.constant 0 : index
    %189 = vector.load %arg2[%c0_56, %c0_57] : memref<128x512xbf16, #tpu.memory_space<vmem>>, vector<128x512xbf16>
    %cst_58 = arith.constant dense<0.000000e+00> : vector<8x512xf32>
    %190 = tpu.matmul %188, %189, %cst_58 {dimension_numbers = #tpu.dot_dimension_numbers<[1], [0], [0], [1], [0, 0, 1, 1], [], []>} : vector<8x128xbf16>, vector<128x512xbf16>, vector<8x512xf32> -> vector<8x512xf32>
    %191 = arith.addf %187, %190 : vector<8x512xf32>
    %192 = vector.extract_strided_slice %191 {offsets = [0, 0], sizes = [8, 128], strides = [1, 1]} : vector<8x512xf32> to vector<8x128xf32>
    %193 = arith.negf %192 : vector<8x128xf32>
    %194 = math.exp %193 : vector<8x128xf32>
    %cst_59 = arith.constant 1.000000e+00 : f32
    %195 = vector.broadcast %cst_59 : f32 to vector<8x128xf32>
    %196 = arith.addf %195, %194 : vector<8x128xf32>
    %197 = arith.divf %195, %196 : vector<8x128xf32>
    %198 = vector.extract_strided_slice %191 {offsets = [0, 128], sizes = [8, 128], strides = [1, 1]} : vector<8x512xf32> to vector<8x128xf32>
    %199 = arith.negf %198 : vector<8x128xf32>
    %200 = math.exp %199 : vector<8x128xf32>
    %cst_60 = arith.constant 1.000000e+00 : f32
    %201 = vector.broadcast %cst_60 : f32 to vector<8x128xf32>
    %202 = arith.addf %201, %200 : vector<8x128xf32>
    %203 = arith.divf %201, %202 : vector<8x128xf32>
    %204 = vector.extract_strided_slice %191 {offsets = [0, 256], sizes = [8, 128], strides = [1, 1]} : vector<8x512xf32> to vector<8x128xf32>
    %205 = math.tanh %204 : vector<8x128xf32>
    %206 = vector.extract_strided_slice %191 {offsets = [0, 384], sizes = [8, 128], strides = [1, 1]} : vector<8x512xf32> to vector<8x128xf32>
    %207 = arith.negf %206 : vector<8x128xf32>
    %208 = math.exp %207 : vector<8x128xf32>
    %cst_61 = arith.constant 1.000000e+00 : f32
    %209 = vector.broadcast %cst_61 : f32 to vector<8x128xf32>
    %210 = arith.addf %209, %208 : vector<8x128xf32>
    %211 = arith.divf %209, %210 : vector<8x128xf32>
    %212 = arith.mulf %203, %178 : vector<8x128xf32>
    %213 = arith.mulf %197, %205 : vector<8x128xf32>
    %214 = arith.addf %212, %213 : vector<8x128xf32>
    %215 = math.tanh %214 : vector<8x128xf32>
    %216 = arith.mulf %211, %215 : vector<8x128xf32>
    %217 = arith.index_cast %c5_i32 : i32 to index
    %c0_62 = arith.constant 0 : index
    %c0_63 = arith.constant 0 : index
    %218 = vector.load %arg3[%217, %c0_62, %c0_63] : memref<8x8x128xf32, #tpu.memory_space<vmem>>, vector<1x8x128xf32>
    %219 = vector.shape_cast %218 : vector<1x8x128xf32> to vector<8x128xf32>
    %220 = vector.shape_cast %216 : vector<8x128xf32> to vector<1x8x128xf32>
    tpu.vector_store %arg3[%217, %c0_62, %c0_63], %220 {strides = array<i32>} : memref<8x8x128xf32, #tpu.memory_space<vmem>>, vector<1x8x128xf32>,
    %c6_i32 = arith.constant 6 : i32
    %221 = arith.index_cast %c6_i32 : i32 to index
    %c0_64 = arith.constant 0 : index
    %c0_65 = arith.constant 0 : index
    %222 = vector.load %arg1[%221, %c0_64, %c0_65] : memref<8x8x512xf32, #tpu.memory_space<vmem>>, vector<1x8x512xf32>
    %223 = vector.shape_cast %222 : vector<1x8x512xf32> to vector<8x512xf32>
    %224 = arith.truncf %216 : vector<8x128xf32> to vector<8x128xbf16>
    %c0_66 = arith.constant 0 : index
    %c0_67 = arith.constant 0 : index
    %225 = vector.load %arg2[%c0_66, %c0_67] : memref<128x512xbf16, #tpu.memory_space<vmem>>, vector<128x512xbf16>
    %cst_68 = arith.constant dense<0.000000e+00> : vector<8x512xf32>
    %226 = tpu.matmul %224, %225, %cst_68 {dimension_numbers = #tpu.dot_dimension_numbers<[1], [0], [0], [1], [0, 0, 1, 1], [], []>} : vector<8x128xbf16>, vector<128x512xbf16>, vector<8x512xf32> -> vector<8x512xf32>
    %227 = arith.addf %223, %226 : vector<8x512xf32>
    %228 = vector.extract_strided_slice %227 {offsets = [0, 0], sizes = [8, 128], strides = [1, 1]} : vector<8x512xf32> to vector<8x128xf32>
    %229 = arith.negf %228 : vector<8x128xf32>
    %230 = math.exp %229 : vector<8x128xf32>
    %cst_69 = arith.constant 1.000000e+00 : f32
    %231 = vector.broadcast %cst_69 : f32 to vector<8x128xf32>
    %232 = arith.addf %231, %230 : vector<8x128xf32>
    %233 = arith.divf %231, %232 : vector<8x128xf32>
    %234 = vector.extract_strided_slice %227 {offsets = [0, 128], sizes = [8, 128], strides = [1, 1]} : vector<8x512xf32> to vector<8x128xf32>
    %235 = arith.negf %234 : vector<8x128xf32>
    %236 = math.exp %235 : vector<8x128xf32>
    %cst_70 = arith.constant 1.000000e+00 : f32
    %237 = vector.broadcast %cst_70 : f32 to vector<8x128xf32>
    %238 = arith.addf %237, %236 : vector<8x128xf32>
    %239 = arith.divf %237, %238 : vector<8x128xf32>
    %240 = vector.extract_strided_slice %227 {offsets = [0, 256], sizes = [8, 128], strides = [1, 1]} : vector<8x512xf32> to vector<8x128xf32>
    %241 = math.tanh %240 : vector<8x128xf32>
    %242 = vector.extract_strided_slice %227 {offsets = [0, 384], sizes = [8, 128], strides = [1, 1]} : vector<8x512xf32> to vector<8x128xf32>
    %243 = arith.negf %242 : vector<8x128xf32>
    %244 = math.exp %243 : vector<8x128xf32>
    %cst_71 = arith.constant 1.000000e+00 : f32
    %245 = vector.broadcast %cst_71 : f32 to vector<8x128xf32>
    %246 = arith.addf %245, %244 : vector<8x128xf32>
    %247 = arith.divf %245, %246 : vector<8x128xf32>
    %248 = arith.mulf %239, %214 : vector<8x128xf32>
    %249 = arith.mulf %233, %241 : vector<8x128xf32>
    %250 = arith.addf %248, %249 : vector<8x128xf32>
    %251 = math.tanh %250 : vector<8x128xf32>
    %252 = arith.mulf %247, %251 : vector<8x128xf32>
    %253 = arith.index_cast %c6_i32 : i32 to index
    %c0_72 = arith.constant 0 : index
    %c0_73 = arith.constant 0 : index
    %254 = vector.load %arg3[%253, %c0_72, %c0_73] : memref<8x8x128xf32, #tpu.memory_space<vmem>>, vector<1x8x128xf32>
    %255 = vector.shape_cast %254 : vector<1x8x128xf32> to vector<8x128xf32>
    %256 = vector.shape_cast %252 : vector<8x128xf32> to vector<1x8x128xf32>
    tpu.vector_store %arg3[%253, %c0_72, %c0_73], %256 {strides = array<i32>} : memref<8x8x128xf32, #tpu.memory_space<vmem>>, vector<1x8x128xf32>,
    %c7_i32 = arith.constant 7 : i32
    %257 = arith.index_cast %c7_i32 : i32 to index
    %c0_74 = arith.constant 0 : index
    %c0_75 = arith.constant 0 : index
    %258 = vector.load %arg1[%257, %c0_74, %c0_75] : memref<8x8x512xf32, #tpu.memory_space<vmem>>, vector<1x8x512xf32>
    %259 = vector.shape_cast %258 : vector<1x8x512xf32> to vector<8x512xf32>
    %260 = arith.truncf %252 : vector<8x128xf32> to vector<8x128xbf16>
    %c0_76 = arith.constant 0 : index
    %c0_77 = arith.constant 0 : index
    %261 = vector.load %arg2[%c0_76, %c0_77] : memref<128x512xbf16, #tpu.memory_space<vmem>>, vector<128x512xbf16>
    %cst_78 = arith.constant dense<0.000000e+00> : vector<8x512xf32>
    %262 = tpu.matmul %260, %261, %cst_78 {dimension_numbers = #tpu.dot_dimension_numbers<[1], [0], [0], [1], [0, 0, 1, 1], [], []>} : vector<8x128xbf16>, vector<128x512xbf16>, vector<8x512xf32> -> vector<8x512xf32>
    %263 = arith.addf %259, %262 : vector<8x512xf32>
    %264 = vector.extract_strided_slice %263 {offsets = [0, 0], sizes = [8, 128], strides = [1, 1]} : vector<8x512xf32> to vector<8x128xf32>
    %265 = arith.negf %264 : vector<8x128xf32>
    %266 = math.exp %265 : vector<8x128xf32>
    %cst_79 = arith.constant 1.000000e+00 : f32
    %267 = vector.broadcast %cst_79 : f32 to vector<8x128xf32>
    %268 = arith.addf %267, %266 : vector<8x128xf32>
    %269 = arith.divf %267, %268 : vector<8x128xf32>
    %270 = vector.extract_strided_slice %263 {offsets = [0, 128], sizes = [8, 128], strides = [1, 1]} : vector<8x512xf32> to vector<8x128xf32>
    %271 = arith.negf %270 : vector<8x128xf32>
    %272 = math.exp %271 : vector<8x128xf32>
    %cst_80 = arith.constant 1.000000e+00 : f32
    %273 = vector.broadcast %cst_80 : f32 to vector<8x128xf32>
    %274 = arith.addf %273, %272 : vector<8x128xf32>
    %275 = arith.divf %273, %274 : vector<8x128xf32>
    %276 = vector.extract_strided_slice %263 {offsets = [0, 256], sizes = [8, 128], strides = [1, 1]} : vector<8x512xf32> to vector<8x128xf32>
    %277 = math.tanh %276 : vector<8x128xf32>
    %278 = vector.extract_strided_slice %263 {offsets = [0, 384], sizes = [8, 128], strides = [1, 1]} : vector<8x512xf32> to vector<8x128xf32>
    %279 = arith.negf %278 : vector<8x128xf32>
    %280 = math.exp %279 : vector<8x128xf32>
    %cst_81 = arith.constant 1.000000e+00 : f32
    %281 = vector.broadcast %cst_81 : f32 to vector<8x128xf32>
    %282 = arith.addf %281, %280 : vector<8x128xf32>
    %283 = arith.divf %281, %282 : vector<8x128xf32>
    %284 = arith.mulf %275, %250 : vector<8x128xf32>
    %285 = arith.mulf %269, %277 : vector<8x128xf32>
    %286 = arith.addf %284, %285 : vector<8x128xf32>
    %287 = math.tanh %286 : vector<8x128xf32>
    %288 = arith.mulf %283, %287 : vector<8x128xf32>
    %289 = arith.index_cast %c7_i32 : i32 to index
    %c0_82 = arith.constant 0 : index
    %c0_83 = arith.constant 0 : index
    %290 = vector.load %arg3[%289, %c0_82, %c0_83] : memref<8x8x128xf32, #tpu.memory_space<vmem>>, vector<1x8x128xf32>
    %291 = vector.shape_cast %290 : vector<1x8x128xf32> to vector<8x128xf32>
    %292 = vector.shape_cast %288 : vector<8x128xf32> to vector<1x8x128xf32>
    tpu.vector_store %arg3[%289, %c0_82, %c0_83], %292 {strides = array<i32>} : memref<8x8x128xf32, #tpu.memory_space<vmem>>, vector<1x8x128xf32>,
    %c8_i32 = arith.constant 8 : i32
    %c0_84 = arith.constant 0 : index
    %c0_85 = arith.constant 0 : index
    %293 = vector.load %arg5[%c0_84, %c0_85] : memref<8x128xf32, #tpu.memory_space<vmem>>, vector<8x128xf32>
    tpu.vector_store %arg5[%c0_84, %c0_85], %288 {strides = array<i32>} : memref<8x128xf32, #tpu.memory_space<vmem>>, vector<8x128xf32>,
    %c0_86 = arith.constant 0 : index
    %c0_87 = arith.constant 0 : index
    %294 = vector.load %arg6[%c0_86, %c0_87] : memref<8x128xf32, #tpu.memory_space<vmem>>, vector<8x128xf32>
    tpu.vector_store %arg6[%c0_86, %c0_87], %286 {strides = array<i32>} : memref<8x128xf32, #tpu.memory_space<vmem>>, vector<8x128xf32>,
    %c0_i32_88 = arith.constant 0 : i32
    %295 = arith.cmpi eq, %arg0, %c0_i32_88 : i32
    %296 = arith.extui %295 : i1 to i32
    %c0_i32_89 = arith.constant 0 : i32
    %297 = arith.cmpi ne, %296, %c0_i32_89 : i32
    scf.if %297 {
      %c0_90 = arith.constant 0 : index
      %c0_91 = arith.constant 0 : index
      %298 = vector.load %arg4[%c0_90, %c0_91] : memref<8x128xf32, #tpu.memory_space<vmem>>, vector<8x128xf32>
      tpu.vector_store %arg4[%c0_90, %c0_91], %286 {strides = array<i32>} : memref<8x128xf32, #tpu.memory_space<vmem>>, vector<8x128xf32>,
    } else {
    }
    return
  }
  func.func @transform_0(%arg0: i32) -> (i32, i32, i32) {
    %c0_i32 = arith.constant 0 : i32
    %c0_i32_0 = arith.constant 0 : i32
    %c0_i32_1 = arith.constant 0 : i32
    return %arg0, %c0_i32, %c0_i32_0 : i32, i32, i32
  }
  func.func @transform_1(%arg0: i32) -> (i32, i32) {
    %c0_i32 = arith.constant 0 : i32
    %c0_i32_0 = arith.constant 0 : i32
    %c0_i32_1 = arith.constant 0 : i32
    return %c0_i32, %c0_i32_0 : i32, i32
  }
  func.func @transform_2(%arg0: i32) -> (i32, i32, i32) {
    %c0_i32 = arith.constant 0 : i32
    %c0_i32_0 = arith.constant 0 : i32
    %c0_i32_1 = arith.constant 0 : i32
    return %arg0, %c0_i32, %c0_i32_0 : i32, i32, i32
  }
  func.func @transform_3(%arg0: i32) -> (i32, i32) {
    %c0_i32 = arith.constant 0 : i32
    %c0_i32_0 = arith.constant 0 : i32
    %c0_i32_1 = arith.constant 0 : i32
    return %c0_i32, %c0_i32_0 : i32, i32
  }
}

</mosaic_0001>

<llo_original>
// kernel: rnn_encoder_forward.1
$region0: #{rnn_encoder_forward.1}
  #allocation0 [shape = 'u32[]', space=smem, size = 0x4, offset = 0x4, fixed_abs, tag = 'smem constant byte address 0x4 - core index']
  #allocation1 [shape = 'u32[144,128]{1,0:T(1,128)}', space=vmem, size = 0x12000, scoped, tag = 'internal scratch']
  #allocation2 [shape = 'f32[8,128]{1,0:T(8,128)}', space=vmem, size = 0x1000, scoped, tag = 'scratch operand']
  #allocation3 [shape = 'f32[8,128]{1,0:T(8,128)}', space=vmem, size = 0x1000, scoped, tag = 'scratch operand']
  %s0 = inlined_call_operand.vmem [shape: f32[8,8,512], index: 0, kind: input, shape index: {}]
  %s1 = inlined_call_operand.vmem [shape: bf16[128,512], index: 1, kind: input, shape index: {}]
  %s2 = inlined_call_operand.vmem [shape: f32[8,8,128], index: 2, kind: output, shape index: {0}]
  %s3 = inlined_call_operand.vmem [shape: f32[8,128], index: 3, kind: output, shape index: {1}]
  %4 = xla_tuple %s2, %s3
  %s5 = sld [smem:[#allocation0]]
  $region34: #{rnn_encoder_forward.1} parent=0
    _
  %s7 = ssub.s32 1, %s5
  %s8 = scalar_select 0, %s7, %s5
  // Predicated region
  $region2: #{rnn_encoder_forward.1} parent=0 // pred_check
    _
  $region3: #{rnn_encoder_forward.1} parent=0 // pred_check_branch
    %10 = sbr.rel (0) target = $region5
  $region4: #{rnn_encoder_forward.1} parent=0 // pred_region
    _
  $region5: #{rnn_encoder_forward.1} parent=0 // pred_fallthru
    _
  // Predicated region
  $region6: #{rnn_encoder_forward.1} parent=0 // pred_check
    _
  $region7: #{rnn_encoder_forward.1} parent=0 // pred_check_branch
    %12 = sbr.rel (0) target = $region9
  $region8: #{rnn_encoder_forward.1} parent=0 // pred_region
    _
  $region9: #{rnn_encoder_forward.1} parent=0 // pred_fallthru
    _
  %p14 = scmp.eq.s32.totalorder 0, 0
  // Predicated region
  $region10: #{rnn_encoder_forward.1} parent=0 // pred_check
    %p15 = pneg %p14
  $region11: #{rnn_encoder_forward.1} parent=0 // pred_check_branch
    %17 = sbr.rel (%p15) target = $region13
  $region12: #{rnn_encoder_forward.1} parent=0 // pred_region
    %18 = vst [vmem:[#allocation2] sm:$0xff] 0.0
    %19 = vst [vmem:[#allocation3] sm:$0xff] 0.0
  $region13: #{rnn_encoder_forward.1} parent=0 // pred_fallthru
    _
  %v20 = vld [vmem:[#allocation2] sm:$0xff]
  %v21 = vld [vmem:[#allocation3] sm:$0xff]
  %v22 = vld [vmem:[%s0] sm:$0xff]
  %v23 = vld [vmem:[%s0 + $0x8] sm:$0xff]
  %v24 = vld [vmem:[%s0 + $0x10] sm:$0xff]
  %v25 = vld [vmem:[%s0 + $0x18] sm:$0xff]
  %v26 = vpack.c.bf16 %v20, %v20
  %v27 = vld [vmem:[%s1] sm:$0xff]
  %v28 = vld [vmem:[%s1 + $0x8] sm:$0xff]
  %v29 = vld [vmem:[%s1 + $0x10] sm:$0xff]
  %v30 = vld [vmem:[%s1 + $0x18] sm:$0xff]
  %v31 = vld [vmem:[%s1 + $0x20] sm:$0xff]
  %v32 = vld [vmem:[%s1 + $0x28] sm:$0xff]
  %v33 = vld [vmem:[%s1 + $0x30] sm:$0xff]
  %v34 = vld [vmem:[%s1 + $0x38] sm:$0xff]
  %v35 = vld [vmem:[%s1 + $0x40] sm:$0xff]
  %v36 = vld [vmem:[%s1 + $0x48] sm:$0xff]
  %v37 = vld [vmem:[%s1 + $0x50] sm:$0xff]
  %v38 = vld [vmem:[%s1 + $0x58] sm:$0xff]
  %v39 = vld [vmem:[%s1 + $0x60] sm:$0xff]
  %v40 = vld [vmem:[%s1 + $0x68] sm:$0xff]
  %v41 = vld [vmem:[%s1 + $0x70] sm:$0xff]
  %v42 = vld [vmem:[%s1 + $0x78] sm:$0xff]
  %v43 = vld [vmem:[%s1 + $0x80] sm:$0xff]
  %v44 = vld [vmem:[%s1 + $0x88] sm:$0xff]
  %v45 = vld [vmem:[%s1 + $0x90] sm:$0xff]
  %v46 = vld [vmem:[%s1 + $0x98] sm:$0xff]
  %v47 = vld [vmem:[%s1 + $0xa0] sm:$0xff]
  %v48 = vld [vmem:[%s1 + $0xa8] sm:$0xff]
  %v49 = vld [vmem:[%s1 + $0xb0] sm:$0xff]
  %v50 = vld [vmem:[%s1 + $0xb8] sm:$0xff]
  %v51 = vld [vmem:[%s1 + $0xc0] sm:$0xff]
  %v52 = vld [vmem:[%s1 + $0xc8] sm:$0xff]
  %v53 = vld [vmem:[%s1 + $0xd0] sm:$0xff]
  %v54 = vld [vmem:[%s1 + $0xd8] sm:$0xff]
  %v55 = vld [vmem:[%s1 + $0xe0] sm:$0xff]
  %v56 = vld [vmem:[%s1 + $0xe8] sm:$0xff]
  %v57 = vld [vmem:[%s1 + $0xf0] sm:$0xff]
  %v58 = vld [vmem:[%s1 + $0xf8] sm:$0xff]
  %v91 = vunpack.c.l.b16 %v27
  %v92 = vunpack.c.h.b16 %v27
  %v93 = vunpack.c.l.b16 %v28
  %v94 = vunpack.c.h.b16 %v28
  %v95 = vunpack.c.l.b16 %v29
  %v96 = vunpack.c.h.b16 %v29
  %v97 = vunpack.c.l.b16 %v30
  %v98 = vunpack.c.h.b16 %v30
  %v99 = vunpack.c.l.b16 %v31
  %v100 = vunpack.c.h.b16 %v31
  %v101 = vunpack.c.l.b16 %v32
  %v102 = vunpack.c.h.b16 %v32
  %v103 = vunpack.c.l.b16 %v33
  %v104 = vunpack.c.h.b16 %v33
  %v105 = vunpack.c.l.b16 %v34
  %v106 = vunpack.c.h.b16 %v34
  %v107 = vunpack.c.l.b16 %v35
  %v108 = vunpack.c.h.b16 %v35
  %v109 = vunpack.c.l.b16 %v36
  %v110 = vunpack.c.h.b16 %v36
  %v111 = vunpack.c.l.b16 %v37
  %v112 = vunpack.c.h.b16 %v37
  %v113 = vunpack.c.l.b16 %v38
  %v114 = vunpack.c.h.b16 %v38
  %v115 = vunpack.c.l.b16 %v39
  %v116 = vunpack.c.h.b16 %v39
  %v117 = vunpack.c.l.b16 %v40
  %v118 = vunpack.c.h.b16 %v40
  %v119 = vunpack.c.l.b16 %v41
  %v120 = vunpack.c.h.b16 %v41
  %v121 = vunpack.c.l.b16 %v42
  %v122 = vunpack.c.h.b16 %v42
  %v123 = vunpack.c.l.b16 %v43
  %v124 = vunpack.c.h.b16 %v43
  %v125 = vunpack.c.l.b16 %v44
  %v126 = vunpack.c.h.b16 %v44
  %v127 = vunpack.c.l.b16 %v45
  %v128 = vunpack.c.h.b16 %v45
  %v129 = vunpack.c.l.b16 %v46
  %v130 = vunpack.c.h.b16 %v46
  %v131 = vunpack.c.l.b16 %v47
  %v132 = vunpack.c.h.b16 %v47
  %v133 = vunpack.c.l.b16 %v48
  %v134 = vunpack.c.h.b16 %v48
  %v135 = vunpack.c.l.b16 %v49
  %v136 = vunpack.c.h.b16 %v49
  %v137 = vunpack.c.l.b16 %v50
  %v138 = vunpack.c.h.b16 %v50
  %v139 = vunpack.c.l.b16 %v51
  %v140 = vunpack.c.h.b16 %v51
  %v141 = vunpack.c.l.b16 %v52
  %v142 = vunpack.c.h.b16 %v52
  %v143 = vunpack.c.l.b16 %v53
  %v144 = vunpack.c.h.b16 %v53
  %v145 = vunpack.c.l.b16 %v54
  %v146 = vunpack.c.h.b16 %v54
  %v147 = vunpack.c.l.b16 %v55
  %v148 = vunpack.c.h.b16 %v55
  %v149 = vunpack.c.l.b16 %v56
  %v150 = vunpack.c.h.b16 %v56
  %v151 = vunpack.c.l.b16 %v57
  %v152 = vunpack.c.h.b16 %v57
  %v153 = vunpack.c.l.b16 %v58
  %v154 = vunpack.c.h.b16 %v58
  %v155 = vpack.c.b16 %v95, %v91
  %v156 = vpack.c.b16 %v96, %v92
  %v157 = vpack.c.b16 %v97, %v93
  %v158 = vpack.c.b16 %v98, %v94
  %v159 = vpack.c.b16 %v103, %v99
  %v160 = vpack.c.b16 %v104, %v100
  %v161 = vpack.c.b16 %v105, %v101
  %v162 = vpack.c.b16 %v106, %v102
  %v163 = vpack.c.b16 %v111, %v107
  %v164 = vpack.c.b16 %v112, %v108
  %v165 = vpack.c.b16 %v113, %v109
  %v166 = vpack.c.b16 %v114, %v110
  %v167 = vpack.c.b16 %v119, %v115
  %v168 = vpack.c.b16 %v120, %v116
  %v169 = vpack.c.b16 %v121, %v117
  %v170 = vpack.c.b16 %v122, %v118
  %v171 = vpack.c.b16 %v127, %v123
  %v172 = vpack.c.b16 %v128, %v124
  %v173 = vpack.c.b16 %v129, %v125
  %v174 = vpack.c.b16 %v130, %v126
  %v175 = vpack.c.b16 %v135, %v131
  %v176 = vpack.c.b16 %v136, %v132
  %v177 = vpack.c.b16 %v137, %v133
  %v178 = vpack.c.b16 %v138, %v134
  %v179 = vpack.c.b16 %v143, %v139
  %v180 = vpack.c.b16 %v144, %v140
  %v181 = vpack.c.b16 %v145, %v141
  %v182 = vpack.c.b16 %v146, %v142
  %v183 = vpack.c.b16 %v151, %v147
  %v184 = vpack.c.b16 %v152, %v148
  %v185 = vpack.c.b16 %v153, %v149
  %v186 = vpack.c.b16 %v154, %v150
  %219 = vmatprep.subr.bf16.mxu0 %v156
  %220 = vmatpush1.bf16.msra.mxu0 %v155
  %221 = vmatprep.subr.bf16.mxu0 %v160
  %222 = vmatpush1.bf16.msra.mxu0 %v159
  %223 = vmatprep.subr.bf16.mxu0 %v164
  %224 = vmatpush1.bf16.msra.mxu0 %v163
  %225 = vmatprep.subr.bf16.mxu0 %v168
  %226 = vmatpush1.bf16.msra.mxu0 %v167
  %227 = vmatprep.subr.bf16.mxu0 %v172
  %228 = vmatpush1.bf16.msra.mxu0 %v171
  %229 = vmatprep.subr.bf16.mxu0 %v176
  %230 = vmatpush1.bf16.msra.mxu0 %v175
  %231 = vmatprep.subr.bf16.mxu0 %v180
  %232 = vmatpush1.bf16.msra.mxu0 %v179
  %233 = vmatprep.subr.bf16.mxu0 %v184
  %234 = vmatpush1.bf16.msra.mxu0 %v183
  %235 = vmatprep.subr.bf16.mxu0 0
  %236 = vmatpush1.bf16.msra.mxu0 0
  %237 = vmatprep.subr.bf16.mxu0 0
  %238 = vmatpush1.bf16.msra.mxu0 0
  %239 = vmatprep.subr.bf16.mxu0 0
  %240 = vmatpush1.bf16.msra.mxu0 0
  %241 = vmatprep.subr.bf16.mxu0 0
  %242 = vmatpush1.bf16.msra.mxu0 0
  %243 = vmatprep.subr.bf16.mxu0 0
  %244 = vmatpush1.bf16.msra.mxu0 0
  %245 = vmatprep.subr.bf16.mxu0 0
  %246 = vmatpush1.bf16.msra.mxu0 0
  %247 = vmatprep.subr.bf16.mxu0 0
  %248 = vmatpush1.bf16.msra.mxu0 0
  %249 = vmatprep.subr.bf16.mxu0 0
  %250 = vmatpush1.bf16.msra.mxu0 0
  %251 = vmatprep.mubr.bf16.mxu0 0
  %252 = vmatmul.mubr.bf16.gmra.mrb[0].mxu0 %v26
  %v253 = vpop.f32.mrb[0].mxu0
  %v254 = vadd.f32 0.0, %v253
  %v255 = vpop.f32.mrb[0].mxu0
  %v256 = vadd.f32 0.0, %v255
  %v257 = vpop.f32.mrb[0].mxu0
  %v258 = vpop.f32.mrb[0].mxu0
  %259 = vdwg.mxu0
  %260 = vmatprep.subr.bf16.mxu0 %v158
  %261 = vmatpush1.bf16.msra.mxu0 %v157
  %262 = vmatprep.subr.bf16.mxu0 %v162
  %263 = vmatpush1.bf16.msra.mxu0 %v161
  %264 = vmatprep.subr.bf16.mxu0 %v166
  %265 = vmatpush1.bf16.msra.mxu0 %v165
  %266 = vmatprep.subr.bf16.mxu0 %v170
  %267 = vmatpush1.bf16.msra.mxu0 %v169
  %268 = vmatprep.subr.bf16.mxu0 %v174
  %269 = vmatpush1.bf16.msra.mxu0 %v173
  %270 = vmatprep.subr.bf16.mxu0 %v178
  %271 = vmatpush1.bf16.msra.mxu0 %v177
  %272 = vmatprep.subr.bf16.mxu0 %v182
  %273 = vmatpush1.bf16.msra.mxu0 %v181
  %274 = vmatprep.subr.bf16.mxu0 %v186
  %275 = vmatpush1.bf16.msra.mxu0 %v185
  %276 = vmatprep.subr.bf16.mxu0 0
  %277 = vmatpush1.bf16.msra.mxu0 0
  %278 = vmatprep.subr.bf16.mxu0 0
  %279 = vmatpush1.bf16.msra.mxu0 0
  %280 = vmatprep.subr.bf16.mxu0 0
  %281 = vmatpush1.bf16.msra.mxu0 0
  %282 = vmatprep.subr.bf16.mxu0 0
  %283 = vmatpush1.bf16.msra.mxu0 0
  %284 = vmatprep.subr.bf16.mxu0 0
  %285 = vmatpush1.bf16.msra.mxu0 0
  %286 = vmatprep.subr.bf16.mxu0 0
  %287 = vmatpush1.bf16.msra.mxu0 0
  %288 = vmatprep.subr.bf16.mxu0 0
  %289 = vmatpush1.bf16.msra.mxu0 0
  %290 = vmatprep.subr.bf16.mxu0 0
  %291 = vmatpush1.bf16.msra.mxu0 0
  %292 = vmatprep.mubr.bf16.mxu0 0
  %293 = vmatmul.mubr.bf16.gmra.mrb[0].mxu0 %v26
  %v294 = vpop.f32.mrb[0].mxu0
  %v295 = vadd.f32 0.0, %v294
  %v296 = vpop.f32.mrb[0].mxu0
  %v297 = vadd.f32 0.0, %v296
  %v298 = vpop.f32.mrb[0].mxu0
  %v299 = vpop.f32.mrb[0].mxu0
  %300 = vdwg.mxu0
  %v301 = vadd.f32 %v22, %v254
  %v302 = vadd.f32 %v23, %v256
  %v303 = vadd.f32 %v24, %v295
  %v304 = vadd.f32 %v25, %v297
  %v305 = vxor.u32 %v301, 2147483648
  %v306 = vmul.f32 %v305, 1.442695
  %v307 = vpow.pop %v306
  %v308 = vadd.f32 %v307, 1.0
  %v309 = vrcp.pop %v308
  %v310 = vmul.f32 1.0, %v309
  %v311 = vxor.u32 %v302, 2147483648
  %v312 = vmul.f32 %v311, 1.442695
  %v313 = vpow.pop %v312
  %v314 = vadd.f32 %v313, 1.0
  %v315 = vrcp.pop %v314
  %v316 = vmul.f32 1.0, %v315
  %v317 = vtanh.pop %v303
  %v318 = vxor.u32 %v304, 2147483648
  %v319 = vmul.f32 %v318, 1.442695
  %v320 = vpow.pop %v319
  %v321 = vadd.f32 %v320, 1.0
  %v322 = vrcp.pop %v321
  %v323 = vmul.f32 1.0, %v322
  %v324 = vmul.f32 %v316, %v21
  %v325 = vmul.f32 %v310, %v317
  %v326 = vadd.f32 %v324, %v325
  %v327 = vtanh.pop %v326
  %v328 = vmul.f32 %v323, %v327
  %329 = vst [vmem:[%s2] sm:$0xff] %v328
  %s330 = scalar_lea.vmem %s0, 32
  %v331 = vld [vmem:[%s330] sm:$0xff]
  %v332 = vld [vmem:[%s330 + $0x8] sm:$0xff]
  %v333 = vld [vmem:[%s330 + $0x10] sm:$0xff]
  %v334 = vld [vmem:[%s330 + $0x18] sm:$0xff]
  %v335 = vpack.c.bf16 %v328, %v328
  %v336 = vld [vmem:[%s1] sm:$0xff]
  %v337 = vld [vmem:[%s1 + $0x8] sm:$0xff]
  %v338 = vld [vmem:[%s1 + $0x10] sm:$0xff]
  %v339 = vld [vmem:[%s1 + $0x18] sm:$0xff]
  %v340 = vld [vmem:[%s1 + $0x20] sm:$0xff]
  %v341 = vld [vmem:[%s1 + $0x28] sm:$0xff]
  %v342 = vld [vmem:[%s1 + $0x30] sm:$0xff]
  %v343 = vld [vmem:[%s1 + $0x38] sm:$0xff]
  %v344 = vld [vmem:[%s1 + $0x40] sm:$0xff]
  %v345 = vld [vmem:[%s1 + $0x48] sm:$0xff]
  %v346 = vld [vmem:[%s1 + $0x50] sm:$0xff]
  %v347 = vld [vmem:[%s1 + $0x58] sm:$0xff]
  %v348 = vld [vmem:[%s1 + $0x60] sm:$0xff]
  %v349 = vld [vmem:[%s1 + $0x68] sm:$0xff]
  %v350 = vld [vmem:[%s1 + $0x70] sm:$0xff]
  %v351 = vld [vmem:[%s1 + $0x78] sm:$0xff]
  %v352 = vld [vmem:[%s1 + $0x80] sm:$0xff]
  %v353 = vld [vmem:[%s1 + $0x88] sm:$0xff]
  %v354 = vld [vmem:[%s1 + $0x90] sm:$0xff]
  %v355 = vld [vmem:[%s1 + $0x98] sm:$0xff]
  %v356 = vld [vmem:[%s1 + $0xa0] sm:$0xff]
  %v357 = vld [vmem:[%s1 + $0xa8] sm:$0xff]
  %v358 = vld [vmem:[%s1 + $0xb0] sm:$0xff]
  %v359 = vld [vmem:[%s1 + $0xb8] sm:$0xff]
  %v360 = vld [vmem:[%s1 + $0xc0] sm:$0xff]
  %v361 = vld [vmem:[%s1 + $0xc8] sm:$0xff]
  %v362 = vld [vmem:[%s1 + $0xd0] sm:$0xff]
  %v363 = vld [vmem:[%s1 + $0xd8] sm:$0xff]
  %v364 = vld [vmem:[%s1 + $0xe0] sm:$0xff]
  %v365 = vld [vmem:[%s1 + $0xe8] sm:$0xff]
  %v366 = vld [vmem:[%s1 + $0xf0] sm:$0xff]
  %v367 = vld [vmem:[%s1 + $0xf8] sm:$0xff]
  %v400 = vunpack.c.l.b16 %v336
  %v401 = vunpack.c.h.b16 %v336
  %v402 = vunpack.c.l.b16 %v337
  %v403 = vunpack.c.h.b16 %v337
  %v404 = vunpack.c.l.b16 %v338
  %v405 = vunpack.c.h.b16 %v338
  %v406 = vunpack.c.l.b16 %v339
  %v407 = vunpack.c.h.b16 %v339
  %v408 = vunpack.c.l.b16 %v340
  %v409 = vunpack.c.h.b16 %v340
  %v410 = vunpack.c.l.b16 %v341
  %v411 = vunpack.c.h.b16 %v341
  %v412 = vunpack.c.l.b16 %v342
  %v413 = vunpack.c.h.b16 %v342
  %v414 = vunpack.c.l.b16 %v343
  %v415 = vunpack.c.h.b16 %v343
  %v416 = vunpack.c.l.b16 %v344
  %v417 = vunpack.c.h.b16 %v344
  %v418 = vunpack.c.l.b16 %v345
  %v419 = vunpack.c.h.b16 %v345
  %v420 = vunpack.c.l.b16 %v346
  %v421 = vunpack.c.h.b16 %v346
  %v422 = vunpack.c.l.b16 %v347
  %v423 = vunpack.c.h.b16 %v347
  %v424 = vunpack.c.l.b16 %v348
  %v425 = vunpack.c.h.b16 %v348
  %v426 = vunpack.c.l.b16 %v349
  %v427 = vunpack.c.h.b16 %v349
  %v428 = vunpack.c.l.b16 %v350
  %v429 = vunpack.c.h.b16 %v350
  %v430 = vunpack.c.l.b16 %v351
  %v431 = vunpack.c.h.b16 %v351
  %v432 = vunpack.c.l.b16 %v352
  %v433 = vunpack.c.h.b16 %v352
  %v434 = vunpack.c.l.b16 %v353
  %v435 = vunpack.c.h.b16 %v353
  %v436 = vunpack.c.l.b16 %v354
  %v437 = vunpack.c.h.b16 %v354
  %v438 = vunpack.c.l.b16 %v355
  %v439 = vunpack.c.h.b16 %v355
  %v440 = vunpack.c.l.b16 %v356
  %v441 = vunpack.c.h.b16 %v356
  %v442 = vunpack.c.l.b16 %v357
  %v443 = vunpack.c.h.b16 %v357
  %v444 = vunpack.c.l.b16 %v358
  %v445 = vunpack.c.h.b16 %v358
  %v446 = vunpack.c.l.b16 %v359
  %v447 = vunpack.c.h.b16 %v359
  %v448 = vunpack.c.l.b16 %v360
  %v449 = vunpack.c.h.b16 %v360
  %v450 = vunpack.c.l.b16 %v361
  %v451 = vunpack.c.h.b16 %v361
  %v452 = vunpack.c.l.b16 %v362
  %v453 = vunpack.c.h.b16 %v362
  %v454 = vunpack.c.l.b16 %v363
  %v455 = vunpack.c.h.b16 %v363
  %v456 = vunpack.c.l.b16 %v364
  %v457 = vunpack.c.h.b16 %v364
  %v458 = vunpack.c.l.b16 %v365
  %v459 = vunpack.c.h.b16 %v365
  %v460 = vunpack.c.l.b16 %v366
  %v461 = vunpack.c.h.b16 %v366
  %v462 = vunpack.c.l.b16 %v367
  %v463 = vunpack.c.h.b16 %v367
  %v464 = vpack.c.b16 %v404, %v400
  %v465 = vpack.c.b16 %v405, %v401
  %v466 = vpack.c.b16 %v406, %v402
  %v467 = vpack.c.b16 %v407, %v403
  %v468 = vpack.c.b16 %v412, %v408
  %v469 = vpack.c.b16 %v413, %v409
  %v470 = vpack.c.b16 %v414, %v410
  %v471 = vpack.c.b16 %v415, %v411
  %v472 = vpack.c.b16 %v420, %v416
  %v473 = vpack.c.b16 %v421, %v417
  %v474 = vpack.c.b16 %v422, %v418
  %v475 = vpack.c.b16 %v423, %v419
  %v476 = vpack.c.b16 %v428, %v424
  %v477 = vpack.c.b16 %v429, %v425
  %v478 = vpack.c.b16 %v430, %v426
  %v479 = vpack.c.b16 %v431, %v427
  %v480 = vpack.c.b16 %v436, %v432
  %v481 = vpack.c.b16 %v437, %v433
  %v482 = vpack.c.b16 %v438, %v434
  %v483 = vpack.c.b16 %v439, %v435
  %v484 = vpack.c.b16 %v444, %v440
  %v485 = vpack.c.b16 %v445, %v441
  %v486 = vpack.c.b16 %v446, %v442
  %v487 = vpack.c.b16 %v447, %v443
  %v488 = vpack.c.b16 %v452, %v448
  %v489 = vpack.c.b16 %v453, %v449
  %v490 = vpack.c.b16 %v454, %v450
  %v491 = vpack.c.b16 %v455, %v451
  %v492 = vpack.c.b16 %v460, %v456
  %v493 = vpack.c.b16 %v461, %v457
  %v494 = vpack.c.b16 %v462, %v458
  %v495 = vpack.c.b16 %v463, %v459
  %528 = vmatprep.subr.bf16.mxu0 %v465
  %529 = vmatpush1.bf16.msra.mxu0 %v464
  %530 = vmatprep.subr.bf16.mxu0 %v469
  %531 = vmatpush1.bf16.msra.mxu0 %v468
  %532 = vmatprep.subr.bf16.mxu0 %v473
  %533 = vmatpush1.bf16.msra.mxu0 %v472
  %534 = vmatprep.subr.bf16.mxu0 %v477
  %535 = vmatpush1.bf16.msra.mxu0 %v476
  %536 = vmatprep.subr.bf16.mxu0 %v481
  %537 = vmatpush1.bf16.msra.mxu0 %v480
  %538 = vmatprep.subr.bf16.mxu0 %v485
  %539 = vmatpush1.bf16.msra.mxu0 %v484
  %540 = vmatprep.subr.bf16.mxu0 %v489
  %541 = vmatpush1.bf16.msra.mxu0 %v488
  %542 = vmatprep.subr.bf16.mxu0 %v493
  %543 = vmatpush1.bf16.msra.mxu0 %v492
  %544 = vmatprep.subr.bf16.mxu0 0
  %545 = vmatpush1.bf16.msra.mxu0 0
  %546 = vmatprep.subr.bf16.mxu0 0
  %547 = vmatpush1.bf16.msra.mxu0 0
  %548 = vmatprep.subr.bf16.mxu0 0
  %549 = vmatpush1.bf16.msra.mxu0 0
  %550 = vmatprep.subr.bf16.mxu0 0
  %551 = vmatpush1.bf16.msra.mxu0 0
  %552 = vmatprep.subr.bf16.mxu0 0
  %553 = vmatpush1.bf16.msra.mxu0 0
  %554 = vmatprep.subr.bf16.mxu0 0
  %555 = vmatpush1.bf16.msra.mxu0 0
  %556 = vmatprep.subr.bf16.mxu0 0
  %557 = vmatpush1.bf16.msra.mxu0 0
  %558 = vmatprep.subr.bf16.mxu0 0
  %559 = vmatpush1.bf16.msra.mxu0 0
  %560 = vmatprep.mubr.bf16.mxu0 0
  %561 = vmatmul.mubr.bf16.gmra.mrb[0].mxu0 %v335
  %v562 = vpop.f32.mrb[0].mxu0
  %v563 = vadd.f32 0.0, %v562
  %v564 = vpop.f32.mrb[0].mxu0
  %v565 = vadd.f32 0.0, %v564
  %v566 = vpop.f32.mrb[0].mxu0
  %v567 = vpop.f32.mrb[0].mxu0
  %568 = vdwg.mxu0
  %569 = vmatprep.subr.bf16.mxu0 %v467
  %570 = vmatpush1.bf16.msra.mxu0 %v466
  %571 = vmatprep.subr.bf16.mxu0 %v471
  %572 = vmatpush1.bf16.msra.mxu0 %v470
  %573 = vmatprep.subr.bf16.mxu0 %v475
  %574 = vmatpush1.bf16.msra.mxu0 %v474
  %575 = vmatprep.subr.bf16.mxu0 %v479
  %576 = vmatpush1.bf16.msra.mxu0 %v478
  %577 = vmatprep.subr.bf16.mxu0 %v483
  %578 = vmatpush1.bf16.msra.mxu0 %v482
  %579 = vmatprep.subr.bf16.mxu0 %v487
  %580 = vmatpush1.bf16.msra.mxu0 %v486
  %581 = vmatprep.subr.bf16.mxu0 %v491
  %582 = vmatpush1.bf16.msra.mxu0 %v490
  %583 = vmatprep.subr.bf16.mxu0 %v495
  %584 = vmatpush1.bf16.msra.mxu0 %v494
  %585 = vmatprep.subr.bf16.mxu0 0
  %586 = vmatpush1.bf16.msra.mxu0 0
  %587 = vmatprep.subr.bf16.mxu0 0
  %588 = vmatpush1.bf16.msra.mxu0 0
  %589 = vmatprep.subr.bf16.mxu0 0
  %590 = vmatpush1.bf16.msra.mxu0 0
  %591 = vmatprep.subr.bf16.mxu0 0
  %592 = vmatpush1.bf16.msra.mxu0 0
  %593 = vmatprep.subr.bf16.mxu0 0
  %594 = vmatpush1.bf16.msra.mxu0 0
  %595 = vmatprep.subr.bf16.mxu0 0
  %596 = vmatpush1.bf16.msra.mxu0 0
  %597 = vmatprep.subr.bf16.mxu0 0
  %598 = vmatpush1.bf16.msra.mxu0 0
  %599 = vmatprep.subr.bf16.mxu0 0
  %600 = vmatpush1.bf16.msra.mxu0 0
  %601 = vmatprep.mubr.bf16.mxu0 0
  %602 = vmatmul.mubr.bf16.gmra.mrb[0].mxu0 %v335
  %v603 = vpop.f32.mrb[0].mxu0
  %v604 = vadd.f32 0.0, %v603
  %v605 = vpop.f32.mrb[0].mxu0
  %v606 = vadd.f32 0.0, %v605
  %v607 = vpop.f32.mrb[0].mxu0
  %v608 = vpop.f32.mrb[0].mxu0
  %609 = vdwg.mxu0
  %v610 = vadd.f32 %v331, %v563
  %v611 = vadd.f32 %v332, %v565
  %v612 = vadd.f32 %v333, %v604
  %v613 = vadd.f32 %v334, %v606
  %v614 = vxor.u32 %v610, 2147483648
  %v615 = vmul.f32 %v614, 1.442695
  %v616 = vpow.pop %v615
  %v617 = vadd.f32 %v616, 1.0
  %v618 = vrcp.pop %v617
  %v619 = vmul.f32 1.0, %v618
  %v620 = vxor.u32 %v611, 2147483648
  %v621 = vmul.f32 %v620, 1.442695
  %v622 = vpow.pop %v621
  %v623 = vadd.f32 %v622, 1.0
  %v624 = vrcp.pop %v623
  %v625 = vmul.f32 1.0, %v624
  %v626 = vtanh.pop %v612
  %v627 = vxor.u32 %v613, 2147483648
  %v628 = vmul.f32 %v627, 1.442695
  %v629 = vpow.pop %v628
  %v630 = vadd.f32 %v629, 1.0
  %v631 = vrcp.pop %v630
  %v632 = vmul.f32 1.0, %v631
  %v633 = vmul.f32 %v625, %v326
  %v634 = vmul.f32 %v619, %v626
  %v635 = vadd.f32 %v633, %v634
  %v636 = vtanh.pop %v635
  %v637 = vmul.f32 %v632, %v636
  %s638 = scalar_lea.vmem %s2, 8
  %639 = vst [vmem:[%s638] sm:$0xff] %v637
  %s640 = scalar_lea.vmem %s0, 64
  %v641 = vld [vmem:[%s640] sm:$0xff]
  %v642 = vld [vmem:[%s640 + $0x8] sm:$0xff]
  %v643 = vld [vmem:[%s640 + $0x10] sm:$0xff]
  %v644 = vld [vmem:[%s640 + $0x18] sm:$0xff]
  %v645 = vpack.c.bf16 %v637, %v637
  %v646 = vld [vmem:[%s1] sm:$0xff]
  %v647 = vld [vmem:[%s1 + $0x8] sm:$0xff]
  %v648 = vld [vmem:[%s1 + $0x10] sm:$0xff]
  %v649 = vld [vmem:[%s1 + $0x18] sm:$0xff]
  %v650 = vld [vmem:[%s1 + $0x20] sm:$0xff]
  %v651 = vld [vmem:[%s1 + $0x28] sm:$0xff]
  %v652 = vld [vmem:[%s1 + $0x30] sm:$0xff]
  %v653 = vld [vmem:[%s1 + $0x38] sm:$0xff]
  %v654 = vld [vmem:[%s1 + $0x40] sm:$0xff]
  %v655 = vld [vmem:[%s1 + $0x48] sm:$0xff]
  %v656 = vld [vmem:[%s1 + $0x50] sm:$0xff]
  %v657 = vld [vmem:[%s1 + $0x58] sm:$0xff]
  %v658 = vld [vmem:[%s1 + $0x60] sm:$0xff]
  %v659 = vld [vmem:[%s1 + $0x68] sm:$0xff]
  %v660 = vld [vmem:[%s1 + $0x70] sm:$0xff]
  %v661 = vld [vmem:[%s1 + $0x78] sm:$0xff]
  %v662 = vld [vmem:[%s1 + $0x80] sm:$0xff]
  %v663 = vld [vmem:[%s1 + $0x88] sm:$0xff]
  %v664 = vld [vmem:[%s1 + $0x90] sm:$0xff]
  %v665 = vld [vmem:[%s1 + $0x98] sm:$0xff]
  %v666 = vld [vmem:[%s1 + $0xa0] sm:$0xff]
  %v667 = vld [vmem:[%s1 + $0xa8] sm:$0xff]
  %v668 = vld [vmem:[%s1 + $0xb0] sm:$0xff]
  %v669 = vld [vmem:[%s1 + $0xb8] sm:$0xff]
  %v670 = vld [vmem:[%s1 + $0xc0] sm:$0xff]
  %v671 = vld [vmem:[%s1 + $0xc8] sm:$0xff]
  %v672 = vld [vmem:[%s1 + $0xd0] sm:$0xff]
  %v673 = vld [vmem:[%s1 + $0xd8] sm:$0xff]
  %v674 = vld [vmem:[%s1 + $0xe0] sm:$0xff]
  %v675 = vld [vmem:[%s1 + $0xe8] sm:$0xff]
  %v676 = vld [vmem:[%s1 + $0xf0] sm:$0xff]
  %v677 = vld [vmem:[%s1 + $0xf8] sm:$0xff]
  %v710 = vunpack.c.l.b16 %v646
  %v711 = vunpack.c.h.b16 %v646
  %v712 = vunpack.c.l.b16 %v647
  %v713 = vunpack.c.h.b16 %v647
  %v714 = vunpack.c.l.b16 %v648
  %v715 = vunpack.c.h.b16 %v648
  %v716 = vunpack.c.l.b16 %v649
  %v717 = vunpack.c.h.b16 %v649
  %v718 = vunpack.c.l.b16 %v650
  %v719 = vunpack.c.h.b16 %v650
  %v720 = vunpack.c.l.b16 %v651
  %v721 = vunpack.c.h.b16 %v651
  %v722 = vunpack.c.l.b16 %v652
  %v723 = vunpack.c.h.b16 %v652
  %v724 = vunpack.c.l.b16 %v653
  %v725 = vunpack.c.h.b16 %v653
  %v726 = vunpack.c.l.b16 %v654
  %v727 = vunpack.c.h.b16 %v654
  %v728 = vunpack.c.l.b16 %v655
  %v729 = vunpack.c.h.b16 %v655
  %v730 = vunpack.c.l.b16 %v656
  %v731 = vunpack.c.h.b16 %v656
  %v732 = vunpack.c.l.b16 %v657
  %v733 = vunpack.c.h.b16 %v657
  %v734 = vunpack.c.l.b16 %v658
  %v735 = vunpack.c.h.b16 %v658
  %v736 = vunpack.c.l.b16 %v659
  %v737 = vunpack.c.h.b16 %v659
  %v738 = vunpack.c.l.b16 %v660
  %v739 = vunpack.c.h.b16 %v660
  %v740 = vunpack.c.l.b16 %v661
  %v741 = vunpack.c.h.b16 %v661
  %v742 = vunpack.c.l.b16 %v662
  %v743 = vunpack.c.h.b16 %v662
  %v744 = vunpack.c.l.b16 %v663
  %v745 = vunpack.c.h.b16 %v663
  %v746 = vunpack.c.l.b16 %v664
  %v747 = vunpack.c.h.b16 %v664
  %v748 = vunpack.c.l.b16 %v665
  %v749 = vunpack.c.h.b16 %v665
  %v750 = vunpack.c.l.b16 %v666
  %v751 = vunpack.c.h.b16 %v666
  %v752 = vunpack.c.l.b16 %v667
  %v753 = vunpack.c.h.b16 %v667
  %v754 = vunpack.c.l.b16 %v668
  %v755 = vunpack.c.h.b16 %v668
  %v756 = vunpack.c.l.b16 %v669
  %v757 = vunpack.c.h.b16 %v669
  %v758 = vunpack.c.l.b16 %v670
  %v759 = vunpack.c.h.b16 %v670
  %v760 = vunpack.c.l.b16 %v671
  %v761 = vunpack.c.h.b16 %v671
  %v762 = vunpack.c.l.b16 %v672
  %v763 = vunpack.c.h.b16 %v672
  %v764 = vunpack.c.l.b16 %v673
  %v765 = vunpack.c.h.b16 %v673
  %v766 = vunpack.c.l.b16 %v674
  %v767 = vunpack.c.h.b16 %v674
  %v768 = vunpack.c.l.b16 %v675
  %v769 = vunpack.c.h.b16 %v675
  %v770 = vunpack.c.l.b16 %v676
  %v771 = vunpack.c.h.b16 %v676
  %v772 = vunpack.c.l.b16 %v677
  %v773 = vunpack.c.h.b16 %v677
  %v774 = vpack.c.b16 %v714, %v710
  %v775 = vpack.c.b16 %v715, %v711
  %v776 = vpack.c.b16 %v716, %v712
  %v777 = vpack.c.b16 %v717, %v713
  %v778 = vpack.c.b16 %v722, %v718
  %v779 = vpack.c.b16 %v723, %v719
  %v780 = vpack.c.b16 %v724, %v720
  %v781 = vpack.c.b16 %v725, %v721
  %v782 = vpack.c.b16 %v730, %v726
  %v783 = vpack.c.b16 %v731, %v727
  %v784 = vpack.c.b16 %v732, %v728
  %v785 = vpack.c.b16 %v733, %v729
  %v786 = vpack.c.b16 %v738, %v734
  %v787 = vpack.c.b16 %v739, %v735
  %v788 = vpack.c.b16 %v740, %v736
  %v789 = vpack.c.b16 %v741, %v737
  %v790 = vpack.c.b16 %v746, %v742
  %v791 = vpack.c.b16 %v747, %v743
  %v792 = vpack.c.b16 %v748, %v744
  %v793 = vpack.c.b16 %v749, %v745
  %v794 = vpack.c.b16 %v754, %v750
  %v795 = vpack.c.b16 %v755, %v751
  %v796 = vpack.c.b16 %v756, %v752
  %v797 = vpack.c.b16 %v757, %v753
  %v798 = vpack.c.b16 %v762, %v758
  %v799 = vpack.c.b16 %v763, %v759
  %v800 = vpack.c.b16 %v764, %v760
  %v801 = vpack.c.b16 %v765, %v761
  %v802 = vpack.c.b16 %v770, %v766
  %v803 = vpack.c.b16 %v771, %v767
  %v804 = vpack.c.b16 %v772, %v768
  %v805 = vpack.c.b16 %v773, %v769
  %838 = vmatprep.subr.bf16.mxu0 %v775
  %839 = vmatpush1.bf16.msra.mxu0 %v774
  %840 = vmatprep.subr.bf16.mxu0 %v779
  %841 = vmatpush1.bf16.msra.mxu0 %v778
  %842 = vmatprep.subr.bf16.mxu0 %v783
  %843 = vmatpush1.bf16.msra.mxu0 %v782
  %844 = vmatprep.subr.bf16.mxu0 %v787
  %845 = vmatpush1.bf16.msra.mxu0 %v786
  %846 = vmatprep.subr.bf16.mxu0 %v791
  %847 = vmatpush1.bf16.msra.mxu0 %v790
  %848 = vmatprep.subr.bf16.mxu0 %v795
  %849 = vmatpush1.bf16.msra.mxu0 %v794
  %850 = vmatprep.subr.bf16.mxu0 %v799
  %851 = vmatpush1.bf16.msra.mxu0 %v798
  %852 = vmatprep.subr.bf16.mxu0 %v803
  %853 = vmatpush1.bf16.msra.mxu0 %v802
  %854 = vmatprep.subr.bf16.mxu0 0
  %855 = vmatpush1.bf16.msra.mxu0 0
  %856 = vmatprep.subr.bf16.mxu0 0
  %857 = vmatpush1.bf16.msra.mxu0 0
  %858 = vmatprep.subr.bf16.mxu0 0
  %859 = vmatpush1.bf16.msra.mxu0 0
  %860 = vmatprep.subr.bf16.mxu0 0
  %861 = vmatpush1.bf16.msra.mxu0 0
  %862 = vmatprep.subr.bf16.mxu0 0
  %863 = vmatpush1.bf16.msra.mxu0 0
  %864 = vmatprep.subr.bf16.mxu0 0
  %865 = vmatpush1.bf16.msra.mxu0 0
  %866 = vmatprep.subr.bf16.mxu0 0
  %867 = vmatpush1.bf16.msra.mxu0 0
  %868 = vmatprep.subr.bf16.mxu0 0
  %869 = vmatpush1.bf16.msra.mxu0 0
  %870 = vmatprep.mubr.bf16.mxu0 0
  %871 = vmatmul.mubr.bf16.gmra.mrb[0].mxu0 %v645
  %v872 = vpop.f32.mrb[0].mxu0
  %v873 = vadd.f32 0.0, %v872
  %v874 = vpop.f32.mrb[0].mxu0
  %v875 = vadd.f32 0.0, %v874
  %v876 = vpop.f32.mrb[0].mxu0
  %v877 = vpop.f32.mrb[0].mxu0
  %878 = vdwg.mxu0
  %879 = vmatprep.subr.bf16.mxu0 %v777
  %880 = vmatpush1.bf16.msra.mxu0 %v776
  %881 = vmatprep.subr.bf16.mxu0 %v781
  %882 = vmatpush1.bf16.msra.mxu0 %v780
  %883 = vmatprep.subr.bf16.mxu0 %v785
  %884 = vmatpush1.bf16.msra.mxu0 %v784
  %885 = vmatprep.subr.bf16.mxu0 %v789
  %886 = vmatpush1.bf16.msra.mxu0 %v788
  %887 = vmatprep.subr.bf16.mxu0 %v793
  %888 = vmatpush1.bf16.msra.mxu0 %v792
  %889 = vmatprep.subr.bf16.mxu0 %v797
  %890 = vmatpush1.bf16.msra.mxu0 %v796
  %891 = vmatprep.subr.bf16.mxu0 %v801
  %892 = vmatpush1.bf16.msra.mxu0 %v800
  %893 = vmatprep.subr.bf16.mxu0 %v805
  %894 = vmatpush1.bf16.msra.mxu0 %v804
  %895 = vmatprep.subr.bf16.mxu0 0
  %896 = vmatpush1.bf16.msra.mxu0 0
  %897 = vmatprep.subr.bf16.mxu0 0
  %898 = vmatpush1.bf16.msra.mxu0 0
  %899 = vmatprep.subr.bf16.mxu0 0
  %900 = vmatpush1.bf16.msra.mxu0 0
  %901 = vmatprep.subr.bf16.mxu0 0
  %902 = vmatpush1.bf16.msra.mxu0 0
  %903 = vmatprep.subr.bf16.mxu0 0
  %904 = vmatpush1.bf16.msra.mxu0 0
  %905 = vmatprep.subr.bf16.mxu0 0
  %906 = vmatpush1.bf16.msra.mxu0 0
  %907 = vmatprep.subr.bf16.mxu0 0
  %908 = vmatpush1.bf16.msra.mxu0 0
  %909 = vmatprep.subr.bf16.mxu0 0
  %910 = vmatpush1.bf16.msra.mxu0 0
  %911 = vmatprep.mubr.bf16.mxu0 0
  %912 = vmatmul.mubr.bf16.gmra.mrb[0].mxu0 %v645
  %v913 = vpop.f32.mrb[0].mxu0
  %v914 = vadd.f32 0.0, %v913
  %v915 = vpop.f32.mrb[0].mxu0
  %v916 = vadd.f32 0.0, %v915
  %v917 = vpop.f32.mrb[0].mxu0
  %v918 = vpop.f32.mrb[0].mxu0
  %919 = vdwg.mxu0
  %v920 = vadd.f32 %v641, %v873
  %v921 = vadd.f32 %v642, %v875
  %v922 = vadd.f32 %v643, %v914
  %v923 = vadd.f32 %v644, %v916
  %v924 = vxor.u32 %v920, 2147483648
  %v925 = vmul.f32 %v924, 1.442695
  %v926 = vpow.pop %v925
  %v927 = vadd.f32 %v926, 1.0
  %v928 = vrcp.pop %v927
  %v929 = vmul.f32 1.0, %v928
  %v930 = vxor.u32 %v921, 2147483648
  %v931 = vmul.f32 %v930, 1.442695
  %v932 = vpow.pop %v931
  %v933 = vadd.f32 %v932, 1.0
  %v934 = vrcp.pop %v933
  %v935 = vmul.f32 1.0, %v934
  %v936 = vtanh.pop %v922
  %v937 = vxor.u32 %v923, 2147483648
  %v938 = vmul.f32 %v937, 1.442695
  %v939 = vpow.pop %v938
  %v940 = vadd.f32 %v939, 1.0
  %v941 = vrcp.pop %v940
  %v942 = vmul.f32 1.0, %v941
  %v943 = vmul.f32 %v935, %v635
  %v944 = vmul.f32 %v929, %v936
  %v945 = vadd.f32 %v943, %v944
  %v946 = vtanh.pop %v945
  %v947 = vmul.f32 %v942, %v946
  %s948 = scalar_lea.vmem %s2, 16
  %949 = vst [vmem:[%s948] sm:$0xff] %v947
  %s950 = scalar_lea.vmem %s0, 96
  %v951 = vld [vmem:[%s950] sm:$0xff]
  %v952 = vld [vmem:[%s950 + $0x8] sm:$0xff]
  %v953 = vld [vmem:[%s950 + $0x10] sm:$0xff]
  %v954 = vld [vmem:[%s950 + $0x18] sm:$0xff]
  %v955 = vpack.c.bf16 %v947, %v947
  %v956 = vld [vmem:[%s1] sm:$0xff]
  %v957 = vld [vmem:[%s1 + $0x8] sm:$0xff]
  %v958 = vld [vmem:[%s1 + $0x10] sm:$0xff]
  %v959 = vld [vmem:[%s1 + $0x18] sm:$0xff]
  %v960 = vld [vmem:[%s1 + $0x20] sm:$0xff]
  %v961 = vld [vmem:[%s1 + $0x28] sm:$0xff]
  %v962 = vld [vmem:[%s1 + $0x30] sm:$0xff]
  %v963 = vld [vmem:[%s1 + $0x38] sm:$0xff]
  %v964 = vld [vmem:[%s1 + $0x40] sm:$0xff]
  %v965 = vld [vmem:[%s1 + $0x48] sm:$0xff]
  %v966 = vld [vmem:[%s1 + $0x50] sm:$0xff]
  %v967 = vld [vmem:[%s1 + $0x58] sm:$0xff]
  %v968 = vld [vmem:[%s1 + $0x60] sm:$0xff]
  %v969 = vld [vmem:[%s1 + $0x68] sm:$0xff]
  %v970 = vld [vmem:[%s1 + $0x70] sm:$0xff]
  %v971 = vld [vmem:[%s1 + $0x78] sm:$0xff]
  %v972 = vld [vmem:[%s1 + $0x80] sm:$0xff]
  %v973 = vld [vmem:[%s1 + $0x88] sm:$0xff]
  %v974 = vld [vmem:[%s1 + $0x90] sm:$0xff]
  %v975 = vld [vmem:[%s1 + $0x98] sm:$0xff]
  %v976 = vld [vmem:[%s1 + $0xa0] sm:$0xff]
  %v977 = vld [vmem:[%s1 + $0xa8] sm:$0xff]
  %v978 = vld [vmem:[%s1 + $0xb0] sm:$0xff]
  %v979 = vld [vmem:[%s1 + $0xb8] sm:$0xff]
  %v980 = vld [vmem:[%s1 + $0xc0] sm:$0xff]
  %v981 = vld [vmem:[%s1 + $0xc8] sm:$0xff]
  %v982 = vld [vmem:[%s1 + $0xd0] sm:$0xff]
  %v983 = vld [vmem:[%s1 + $0xd8] sm:$0xff]
  %v984 = vld [vmem:[%s1 + $0xe0] sm:$0xff]
  %v985 = vld [vmem:[%s1 + $0xe8] sm:$0xff]
  %v986 = vld [vmem:[%s1 + $0xf0] sm:$0xff]
  %v987 = vld [vmem:[%s1 + $0xf8] sm:$0xff]
  %v1020 = vunpack.c.l.b16 %v956
  %v1021 = vunpack.c.h.b16 %v956
  %v1022 = vunpack.c.l.b16 %v957
  %v1023 = vunpack.c.h.b16 %v957
  %v1024 = vunpack.c.l.b16 %v958
  %v1025 = vunpack.c.h.b16 %v958
  %v1026 = vunpack.c.l.b16 %v959
  %v1027 = vunpack.c.h.b16 %v959
  %v1028 = vunpack.c.l.b16 %v960
  %v1029 = vunpack.c.h.b16 %v960
  %v1030 = vunpack.c.l.b16 %v961
  %v1031 = vunpack.c.h.b16 %v961
  %v1032 = vunpack.c.l.b16 %v962
  %v1033 = vunpack.c.h.b16 %v962
  %v1034 = vunpack.c.l.b16 %v963
  %v1035 = vunpack.c.h.b16 %v963
  %v1036 = vunpack.c.l.b16 %v964
  %v1037 = vunpack.c.h.b16 %v964
  %v1038 = vunpack.c.l.b16 %v965
  %v1039 = vunpack.c.h.b16 %v965
  %v1040 = vunpack.c.l.b16 %v966
  %v1041 = vunpack.c.h.b16 %v966
  %v1042 = vunpack.c.l.b16 %v967
  %v1043 = vunpack.c.h.b16 %v967
  %v1044 = vunpack.c.l.b16 %v968
  %v1045 = vunpack.c.h.b16 %v968
  %v1046 = vunpack.c.l.b16 %v969
  %v1047 = vunpack.c.h.b16 %v969
  %v1048 = vunpack.c.l.b16 %v970
  %v1049 = vunpack.c.h.b16 %v970
  %v1050 = vunpack.c.l.b16 %v971
  %v1051 = vunpack.c.h.b16 %v971
  %v1052 = vunpack.c.l.b16 %v972
  %v1053 = vunpack.c.h.b16 %v972
  %v1054 = vunpack.c.l.b16 %v973
  %v1055 = vunpack.c.h.b16 %v973
  %v1056 = vunpack.c.l.b16 %v974
  %v1057 = vunpack.c.h.b16 %v974
  %v1058 = vunpack.c.l.b16 %v975
  %v1059 = vunpack.c.h.b16 %v975
  %v1060 = vunpack.c.l.b16 %v976
  %v1061 = vunpack.c.h.b16 %v976
  %v1062 = vunpack.c.l.b16 %v977
  %v1063 = vunpack.c.h.b16 %v977
  %v1064 = vunpack.c.l.b16 %v978
  %v1065 = vunpack.c.h.b16 %v978
  %v1066 = vunpack.c.l.b16 %v979
  %v1067 = vunpack.c.h.b16 %v979
  %v1068 = vunpack.c.l.b16 %v980
  %v1069 = vunpack.c.h.b16 %v980
  %v1070 = vunpack.c.l.b16 %v981
  %v1071 = vunpack.c.h.b16 %v981
  %v1072 = vunpack.c.l.b16 %v982
  %v1073 = vunpack.c.h.b16 %v982
  %v1074 = vunpack.c.l.b16 %v983
  %v1075 = vunpack.c.h.b16 %v983
  %v1076 = vunpack.c.l.b16 %v984
  %v1077 = vunpack.c.h.b16 %v984
  %v1078 = vunpack.c.l.b16 %v985
  %v1079 = vunpack.c.h.b16 %v985
  %v1080 = vunpack.c.l.b16 %v986
  %v1081 = vunpack.c.h.b16 %v986
  %v1082 = vunpack.c.l.b16 %v987
  %v1083 = vunpack.c.h.b16 %v987
  %v1084 = vpack.c.b16 %v1024, %v1020
  %v1085 = vpack.c.b16 %v1025, %v1021
  %v1086 = vpack.c.b16 %v1026, %v1022
  %v1087 = vpack.c.b16 %v1027, %v1023
  %v1088 = vpack.c.b16 %v1032, %v1028
  %v1089 = vpack.c.b16 %v1033, %v1029
  %v1090 = vpack.c.b16 %v1034, %v1030
  %v1091 = vpack.c.b16 %v1035, %v1031
  %v1092 = vpack.c.b16 %v1040, %v1036
  %v1093 = vpack.c.b16 %v1041, %v1037
  %v1094 = vpack.c.b16 %v1042, %v1038
  %v1095 = vpack.c.b16 %v1043, %v1039
  %v1096 = vpack.c.b16 %v1048, %v1044
  %v1097 = vpack.c.b16 %v1049, %v1045
  %v1098 = vpack.c.b16 %v1050, %v1046
  %v1099 = vpack.c.b16 %v1051, %v1047
  %v1100 = vpack.c.b16 %v1056, %v1052
  %v1101 = vpack.c.b16 %v1057, %v1053
  %v1102 = vpack.c.b16 %v1058, %v1054
  %v1103 = vpack.c.b16 %v1059, %v1055
  %v1104 = vpack.c.b16 %v1064, %v1060
  %v1105 = vpack.c.b16 %v1065, %v1061
  %v1106 = vpack.c.b16 %v1066, %v1062
  %v1107 = vpack.c.b16 %v1067, %v1063
  %v1108 = vpack.c.b16 %v1072, %v1068
  %v1109 = vpack.c.b16 %v1073, %v1069
  %v1110 = vpack.c.b16 %v1074, %v1070
  %v1111 = vpack.c.b16 %v1075, %v1071
  %v1112 = vpack.c.b16 %v1080, %v1076
  %v1113 = vpack.c.b16 %v1081, %v1077
  %v1114 = vpack.c.b16 %v1082, %v1078
  %v1115 = vpack.c.b16 %v1083, %v1079
  %1148 = vmatprep.subr.bf16.mxu0 %v1085
  %1149 = vmatpush1.bf16.msra.mxu0 %v1084
  %1150 = vmatprep.subr.bf16.mxu0 %v1089
  %1151 = vmatpush1.bf16.msra.mxu0 %v1088
  %1152 = vmatprep.subr.bf16.mxu0 %v1093
  %1153 = vmatpush1.bf16.msra.mxu0 %v1092
  %1154 = vmatprep.subr.bf16.mxu0 %v1097
  %1155 = vmatpush1.bf16.msra.mxu0 %v1096
  %1156 = vmatprep.subr.bf16.mxu0 %v1101
  %1157 = vmatpush1.bf16.msra.mxu0 %v1100
  %1158 = vmatprep.subr.bf16.mxu0 %v1105
  %1159 = vmatpush1.bf16.msra.mxu0 %v1104
  %1160 = vmatprep.subr.bf16.mxu0 %v1109
  %1161 = vmatpush1.bf16.msra.mxu0 %v1108
  %1162 = vmatprep.subr.bf16.mxu0 %v1113
  %1163 = vmatpush1.bf16.msra.mxu0 %v1112
  %1164 = vmatprep.subr.bf16.mxu0 0
  %1165 = vmatpush1.bf16.msra.mxu0 0
  %1166 = vmatprep.subr.bf16.mxu0 0
  %1167 = vmatpush1.bf16.msra.mxu0 0
  %1168 = vmatprep.subr.bf16.mxu0 0
  %1169 = vmatpush1.bf16.msra.mxu0 0
  %1170 = vmatprep.subr.bf16.mxu0 0
  %1171 = vmatpush1.bf16.msra.mxu0 0
  %1172 = vmatprep.subr.bf16.mxu0 0
  %1173 = vmatpush1.bf16.msra.mxu0 0
  %1174 = vmatprep.subr.bf16.mxu0 0
  %1175 = vmatpush1.bf16.msra.mxu0 0
  %1176 = vmatprep.subr.bf16.mxu0 0
  %1177 = vmatpush1.bf16.msra.mxu0 0
  %1178 = vmatprep.subr.bf16.mxu0 0
  %1179 = vmatpush1.bf16.msra.mxu0 0
  %1180 = vmatprep.mubr.bf16.mxu0 0
  %1181 = vmatmul.mubr.bf16.gmra.mrb[0].mxu0 %v955
  %v1182 = vpop.f32.mrb[0].mxu0
  %v1183 = vadd.f32 0.0, %v1182
  %v1184 = vpop.f32.mrb[0].mxu0
  %v1185 = vadd.f32 0.0, %v1184
  %v1186 = vpop.f32.mrb[0].mxu0
  %v1187 = vpop.f32.mrb[0].mxu0
  %1188 = vdwg.mxu0
  %1189 = vmatprep.subr.bf16.mxu0 %v1087
  %1190 = vmatpush1.bf16.msra.mxu0 %v1086
  %1191 = vmatprep.subr.bf16.mxu0 %v1091
  %1192 = vmatpush1.bf16.msra.mxu0 %v1090
  %1193 = vmatprep.subr.bf16.mxu0 %v1095
  %1194 = vmatpush1.bf16.msra.mxu0 %v1094
  %1195 = vmatprep.subr.bf16.mxu0 %v1099
  %1196 = vmatpush1.bf16.msra.mxu0 %v1098
  %1197 = vmatprep.subr.bf16.mxu0 %v1103
  %1198 = vmatpush1.bf16.msra.mxu0 %v1102
  %1199 = vmatprep.subr.bf16.mxu0 %v1107
  %1200 = vmatpush1.bf16.msra.mxu0 %v1106
  %1201 = vmatprep.subr.bf16.mxu0 %v1111
  %1202 = vmatpush1.bf16.msra.mxu0 %v1110
  %1203 = vmatprep.subr.bf16.mxu0 %v1115
  %1204 = vmatpush1.bf16.msra.mxu0 %v1114
  %1205 = vmatprep.subr.bf16.mxu0 0
  %1206 = vmatpush1.bf16.msra.mxu0 0
  %1207 = vmatprep.subr.bf16.mxu0 0
  %1208 = vmatpush1.bf16.msra.mxu0 0
  %1209 = vmatprep.subr.bf16.mxu0 0
  %1210 = vmatpush1.bf16.msra.mxu0 0
  %1211 = vmatprep.subr.bf16.mxu0 0
  %1212 = vmatpush1.bf16.msra.mxu0 0
  %1213 = vmatprep.subr.bf16.mxu0 0
  %1214 = vmatpush1.bf16.msra.mxu0 0
  %1215 = vmatprep.subr.bf16.mxu0 0
  %1216 = vmatpush1.bf16.msra.mxu0 0
  %1217 = vmatprep.subr.bf16.mxu0 0
  %1218 = vmatpush1.bf16.msra.mxu0 0
  %1219 = vmatprep.subr.bf16.mxu0 0
  %1220 = vmatpush1.bf16.msra.mxu0 0
  %1221 = vmatprep.mubr.bf16.mxu0 0
  %1222 = vmatmul.mubr.bf16.gmra.mrb[0].mxu0 %v955
  %v1223 = vpop.f32.mrb[0].mxu0
  %v1224 = vadd.f32 0.0, %v1223
  %v1225 = vpop.f32.mrb[0].mxu0
  %v1226 = vadd.f32 0.0, %v1225
  %v1227 = vpop.f32.mrb[0].mxu0
  %v1228 = vpop.f32.mrb[0].mxu0
  %1229 = vdwg.mxu0
  %v1230 = vadd.f32 %v951, %v1183
  %v1231 = vadd.f32 %v952, %v1185
  %v1232 = vadd.f32 %v953, %v1224
  %v1233 = vadd.f32 %v954, %v1226
  %v1234 = vxor.u32 %v1230, 2147483648
  %v1235 = vmul.f32 %v1234, 1.442695
  %v1236 = vpow.pop %v1235
  %v1237 = vadd.f32 %v1236, 1.0
  %v1238 = vrcp.pop %v1237
  %v1239 = vmul.f32 1.0, %v1238
  %v1240 = vxor.u32 %v1231, 2147483648
  %v1241 = vmul.f32 %v1240, 1.442695
  %v1242 = vpow.pop %v1241
  %v1243 = vadd.f32 %v1242, 1.0
  %v1244 = vrcp.pop %v1243
  %v1245 = vmul.f32 1.0, %v1244
  %v1246 = vtanh.pop %v1232
  %v1247 = vxor.u32 %v1233, 2147483648
  %v1248 = vmul.f32 %v1247, 1.442695
  %v1249 = vpow.pop %v1248
  %v1250 = vadd.f32 %v1249, 1.0
  %v1251 = vrcp.pop %v1250
  %v1252 = vmul.f32 1.0, %v1251
  %v1253 = vmul.f32 %v1245, %v945
  %v1254 = vmul.f32 %v1239, %v1246
  %v1255 = vadd.f32 %v1253, %v1254
  %v1256 = vtanh.pop %v1255
  %v1257 = vmul.f32 %v1252, %v1256
  %s1258 = scalar_lea.vmem %s2, 24
  %1259 = vst [vmem:[%s1258] sm:$0xff] %v1257
  %s1260 = scalar_lea.vmem %s0, 128
  %v1261 = vld [vmem:[%s1260] sm:$0xff]
  %v1262 = vld [vmem:[%s1260 + $0x8] sm:$0xff]
  %v1263 = vld [vmem:[%s1260 + $0x10] sm:$0xff]
  %v1264 = vld [vmem:[%s1260 + $0x18] sm:$0xff]
  %v1265 = vpack.c.bf16 %v1257, %v1257
  %v1266 = vld [vmem:[%s1] sm:$0xff]
  %v1267 = vld [vmem:[%s1 + $0x8] sm:$0xff]
  %v1268 = vld [vmem:[%s1 + $0x10] sm:$0xff]
  %v1269 = vld [vmem:[%s1 + $0x18] sm:$0xff]
  %v1270 = vld [vmem:[%s1 + $0x20] sm:$0xff]
  %v1271 = vld [vmem:[%s1 + $0x28] sm:$0xff]
  %v1272 = vld [vmem:[%s1 + $0x30] sm:$0xff]
  %v1273 = vld [vmem:[%s1 + $0x38] sm:$0xff]
  %v1274 = vld [vmem:[%s1 + $0x40] sm:$0xff]
  %v1275 = vld [vmem:[%s1 + $0x48] sm:$0xff]
  %v1276 = vld [vmem:[%s1 + $0x50] sm:$0xff]
  %v1277 = vld [vmem:[%s1 + $0x58] sm:$0xff]
  %v1278 = vld [vmem:[%s1 + $0x60] sm:$0xff]
  %v1279 = vld [vmem:[%s1 + $0x68] sm:$0xff]
  %v1280 = vld [vmem:[%s1 + $0x70] sm:$0xff]
  %v1281 = vld [vmem:[%s1 + $0x78] sm:$0xff]
  %v1282 = vld [vmem:[%s1 + $0x80] sm:$0xff]
  %v1283 = vld [vmem:[%s1 + $0x88] sm:$0xff]
  %v1284 = vld [vmem:[%s1 + $0x90] sm:$0xff]
  %v1285 = vld [vmem:[%s1 + $0x98] sm:$0xff]
  %v1286 = vld [vmem:[%s1 + $0xa0] sm:$0xff]
  %v1287 = vld [vmem:[%s1 + $0xa8] sm:$0xff]
  %v1288 = vld [vmem:[%s1 + $0xb0] sm:$0xff]
  %v1289 = vld [vmem:[%s1 + $0xb8] sm:$0xff]
  %v1290 = vld [vmem:[%s1 + $0xc0] sm:$0xff]
  %v1291 = vld [vmem:[%s1 + $0xc8] sm:$0xff]
  %v1292 = vld [vmem:[%s1 + $0xd0] sm:$0xff]
  %v1293 = vld [vmem:[%s1 + $0xd8] sm:$0xff]
  %v1294 = vld [vmem:[%s1 + $0xe0] sm:$0xff]
  %v1295 = vld [vmem:[%s1 + $0xe8] sm:$0xff]
  %v1296 = vld [vmem:[%s1 + $0xf0] sm:$0xff]
  %v1297 = vld [vmem:[%s1 + $0xf8] sm:$0xff]
  %v1330 = vunpack.c.l.b16 %v1266
  %v1331 = vunpack.c.h.b16 %v1266
  %v1332 = vunpack.c.l.b16 %v1267
  %v1333 = vunpack.c.h.b16 %v1267
  %v1334 = vunpack.c.l.b16 %v1268
  %v1335 = vunpack.c.h.b16 %v1268
  %v1336 = vunpack.c.l.b16 %v1269
  %v1337 = vunpack.c.h.b16 %v1269
  %v1338 = vunpack.c.l.b16 %v1270
  %v1339 = vunpack.c.h.b16 %v1270
  %v1340 = vunpack.c.l.b16 %v1271
  %v1341 = vunpack.c.h.b16 %v1271
  %v1342 = vunpack.c.l.b16 %v1272
  %v1343 = vunpack.c.h.b16 %v1272
  %v1344 = vunpack.c.l.b16 %v1273
  %v1345 = vunpack.c.h.b16 %v1273
  %v1346 = vunpack.c.l.b16 %v1274
  %v1347 = vunpack.c.h.b16 %v1274
  %v1348 = vunpack.c.l.b16 %v1275
  %v1349 = vunpack.c.h.b16 %v1275
  %v1350 = vunpack.c.l.b16 %v1276
  %v1351 = vunpack.c.h.b16 %v1276
  %v1352 = vunpack.c.l.b16 %v1277
  %v1353 = vunpack.c.h.b16 %v1277
  %v1354 = vunpack.c.l.b16 %v1278
  %v1355 = vunpack.c.h.b16 %v1278
  %v1356 = vunpack.c.l.b16 %v1279
  %v1357 = vunpack.c.h.b16 %v1279
  %v1358 = vunpack.c.l.b16 %v1280
  %v1359 = vunpack.c.h.b16 %v1280
  %v1360 = vunpack.c.l.b16 %v1281
  %v1361 = vunpack.c.h.b16 %v1281
  %v1362 = vunpack.c.l.b16 %v1282
  %v1363 = vunpack.c.h.b16 %v1282
  %v1364 = vunpack.c.l.b16 %v1283
  %v1365 = vunpack.c.h.b16 %v1283
  %v1366 = vunpack.c.l.b16 %v1284
  %v1367 = vunpack.c.h.b16 %v1284
  %v1368 = vunpack.c.l.b16 %v1285
  %v1369 = vunpack.c.h.b16 %v1285
  %v1370 = vunpack.c.l.b16 %v1286
  %v1371 = vunpack.c.h.b16 %v1286
  %v1372 = vunpack.c.l.b16 %v1287
  %v1373 = vunpack.c.h.b16 %v1287
  %v1374 = vunpack.c.l.b16 %v1288
  %v1375 = vunpack.c.h.b16 %v1288
  %v1376 = vunpack.c.l.b16 %v1289
  %v1377 = vunpack.c.h.b16 %v1289
  %v1378 = vunpack.c.l.b16 %v1290
  %v1379 = vunpack.c.h.b16 %v1290
  %v1380 = vunpack.c.l.b16 %v1291
  %v1381 = vunpack.c.h.b16 %v1291
  %v1382 = vunpack.c.l.b16 %v1292
  %v1383 = vunpack.c.h.b16 %v1292
  %v1384 = vunpack.c.l.b16 %v1293
  %v1385 = vunpack.c.h.b16 %v1293
  %v1386 = vunpack.c.l.b16 %v1294
  %v1387 = vunpack.c.h.b16 %v1294
  %v1388 = vunpack.c.l.b16 %v1295
  %v1389 = vunpack.c.h.b16 %v1295
  %v1390 = vunpack.c.l.b16 %v1296
  %v1391 = vunpack.c.h.b16 %v1296
  %v1392 = vunpack.c.l.b16 %v1297
  %v1393 = vunpack.c.h.b16 %v1297
  %v1394 = vpack.c.b16 %v1334, %v1330
  %v1395 = vpack.c.b16 %v1335, %v1331
  %v1396 = vpack.c.b16 %v1336, %v1332
  %v1397 = vpack.c.b16 %v1337, %v1333
  %v1398 = vpack.c.b16 %v1342, %v1338
  %v1399 = vpack.c.b16 %v1343, %v1339
  %v1400 = vpack.c.b16 %v1344, %v1340
  %v1401 = vpack.c.b16 %v1345, %v1341
  %v1402 = vpack.c.b16 %v1350, %v1346
  %v1403 = vpack.c.b16 %v1351, %v1347
  %v1404 = vpack.c.b16 %v1352, %v1348
  %v1405 = vpack.c.b16 %v1353, %v1349
  %v1406 = vpack.c.b16 %v1358, %v1354
  %v1407 = vpack.c.b16 %v1359, %v1355
  %v1408 = vpack.c.b16 %v1360, %v1356
  %v1409 = vpack.c.b16 %v1361, %v1357
  %v1410 = vpack.c.b16 %v1366, %v1362
  %v1411 = vpack.c.b16 %v1367, %v1363
  %v1412 = vpack.c.b16 %v1368, %v1364
  %v1413 = vpack.c.b16 %v1369, %v1365
  %v1414 = vpack.c.b16 %v1374, %v1370
  %v1415 = vpack.c.b16 %v1375, %v1371
  %v1416 = vpack.c.b16 %v1376, %v1372
  %v1417 = vpack.c.b16 %v1377, %v1373
  %v1418 = vpack.c.b16 %v1382, %v1378
  %v1419 = vpack.c.b16 %v1383, %v1379
  %v1420 = vpack.c.b16 %v1384, %v1380
  %v1421 = vpack.c.b16 %v1385, %v1381
  %v1422 = vpack.c.b16 %v1390, %v1386
  %v1423 = vpack.c.b16 %v1391, %v1387
  %v1424 = vpack.c.b16 %v1392, %v1388
  %v1425 = vpack.c.b16 %v1393, %v1389
  %1458 = vmatprep.subr.bf16.mxu0 %v1395
  %1459 = vmatpush1.bf16.msra.mxu0 %v1394
  %1460 = vmatprep.subr.bf16.mxu0 %v1399
  %1461 = vmatpush1.bf16.msra.mxu0 %v1398
  %1462 = vmatprep.subr.bf16.mxu0 %v1403
  %1463 = vmatpush1.bf16.msra.mxu0 %v1402
  %1464 = vmatprep.subr.bf16.mxu0 %v1407
  %1465 = vmatpush1.bf16.msra.mxu0 %v1406
  %1466 = vmatprep.subr.bf16.mxu0 %v1411
  %1467 = vmatpush1.bf16.msra.mxu0 %v1410
  %1468 = vmatprep.subr.bf16.mxu0 %v1415
  %1469 = vmatpush1.bf16.msra.mxu0 %v1414
  %1470 = vmatprep.subr.bf16.mxu0 %v1419
  %1471 = vmatpush1.bf16.msra.mxu0 %v1418
  %1472 = vmatprep.subr.bf16.mxu0 %v1423
  %1473 = vmatpush1.bf16.msra.mxu0 %v1422
  %1474 = vmatprep.subr.bf16.mxu0 0
  %1475 = vmatpush1.bf16.msra.mxu0 0
  %1476 = vmatprep.subr.bf16.mxu0 0
  %1477 = vmatpush1.bf16.msra.mxu0 0
  %1478 = vmatprep.subr.bf16.mxu0 0
  %1479 = vmatpush1.bf16.msra.mxu0 0
  %1480 = vmatprep.subr.bf16.mxu0 0
  %1481 = vmatpush1.bf16.msra.mxu0 0
  %1482 = vmatprep.subr.bf16.mxu0 0
  %1483 = vmatpush1.bf16.msra.mxu0 0
  %1484 = vmatprep.subr.bf16.mxu0 0
  %1485 = vmatpush1.bf16.msra.mxu0 0
  %1486 = vmatprep.subr.bf16.mxu0 0
  %1487 = vmatpush1.bf16.msra.mxu0 0
  %1488 = vmatprep.subr.bf16.mxu0 0
  %1489 = vmatpush1.bf16.msra.mxu0 0
  %1490 = vmatprep.mubr.bf16.mxu0 0
  %1491 = vmatmul.mubr.bf16.gmra.mrb[0].mxu0 %v1265
  %v1492 = vpop.f32.mrb[0].mxu0
  %v1493 = vadd.f32 0.0, %v1492
  %v1494 = vpop.f32.mrb[0].mxu0
  %v1495 = vadd.f32 0.0, %v1494
  %v1496 = vpop.f32.mrb[0].mxu0
  %v1497 = vpop.f32.mrb[0].mxu0
  %1498 = vdwg.mxu0
  %1499 = vmatprep.subr.bf16.mxu0 %v1397
  %1500 = vmatpush1.bf16.msra.mxu0 %v1396
  %1501 = vmatprep.subr.bf16.mxu0 %v1401
  %1502 = vmatpush1.bf16.msra.mxu0 %v1400
  %1503 = vmatprep.subr.bf16.mxu0 %v1405
  %1504 = vmatpush1.bf16.msra.mxu0 %v1404
  %1505 = vmatprep.subr.bf16.mxu0 %v1409
  %1506 = vmatpush1.bf16.msra.mxu0 %v1408
  %1507 = vmatprep.subr.bf16.mxu0 %v1413
  %1508 = vmatpush1.bf16.msra.mxu0 %v1412
  %1509 = vmatprep.subr.bf16.mxu0 %v1417
  %1510 = vmatpush1.bf16.msra.mxu0 %v1416
  %1511 = vmatprep.subr.bf16.mxu0 %v1421
  %1512 = vmatpush1.bf16.msra.mxu0 %v1420
  %1513 = vmatprep.subr.bf16.mxu0 %v1425
  %1514 = vmatpush1.bf16.msra.mxu0 %v1424
  %1515 = vmatprep.subr.bf16.mxu0 0
  %1516 = vmatpush1.bf16.msra.mxu0 0
  %1517 = vmatprep.subr.bf16.mxu0 0
  %1518 = vmatpush1.bf16.msra.mxu0 0
  %1519 = vmatprep.subr.bf16.mxu0 0
  %1520 = vmatpush1.bf16.msra.mxu0 0
  %1521 = vmatprep.subr.bf16.mxu0 0
  %1522 = vmatpush1.bf16.msra.mxu0 0
  %1523 = vmatprep.subr.bf16.mxu0 0
  %1524 = vmatpush1.bf16.msra.mxu0 0
  %1525 = vmatprep.subr.bf16.mxu0 0
  %1526 = vmatpush1.bf16.msra.mxu0 0
  %1527 = vmatprep.subr.bf16.mxu0 0
  %1528 = vmatpush1.bf16.msra.mxu0 0
  %1529 = vmatprep.subr.bf16.mxu0 0
  %1530 = vmatpush1.bf16.msra.mxu0 0
  %1531 = vmatprep.mubr.bf16.mxu0 0
  %1532 = vmatmul.mubr.bf16.gmra.mrb[0].mxu0 %v1265
  %v1533 = vpop.f32.mrb[0].mxu0
  %v1534 = vadd.f32 0.0, %v1533
  %v1535 = vpop.f32.mrb[0].mxu0
  %v1536 = vadd.f32 0.0, %v1535
  %v1537 = vpop.f32.mrb[0].mxu0
  %v1538 = vpop.f32.mrb[0].mxu0
  %1539 = vdwg.mxu0
  %v1540 = vadd.f32 %v1261, %v1493
  %v1541 = vadd.f32 %v1262, %v1495
  %v1542 = vadd.f32 %v1263, %v1534
  %v1543 = vadd.f32 %v1264, %v1536
  %v1544 = vxor.u32 %v1540, 2147483648
  %v1545 = vmul.f32 %v1544, 1.442695
  %v1546 = vpow.pop %v1545
  %v1547 = vadd.f32 %v1546, 1.0
  %v1548 = vrcp.pop %v1547
  %v1549 = vmul.f32 1.0, %v1548
  %v1550 = vxor.u32 %v1541, 2147483648
  %v1551 = vmul.f32 %v1550, 1.442695
  %v1552 = vpow.pop %v1551
  %v1553 = vadd.f32 %v1552, 1.0
  %v1554 = vrcp.pop %v1553
  %v1555 = vmul.f32 1.0, %v1554
  %v1556 = vtanh.pop %v1542
  %v1557 = vxor.u32 %v1543, 2147483648
  %v1558 = vmul.f32 %v1557, 1.442695
  %v1559 = vpow.pop %v1558
  %v1560 = vadd.f32 %v1559, 1.0
  %v1561 = vrcp.pop %v1560
  %v1562 = vmul.f32 1.0, %v1561
  %v1563 = vmul.f32 %v1555, %v1255
  %v1564 = vmul.f32 %v1549, %v1556
  %v1565 = vadd.f32 %v1563, %v1564
  %v1566 = vtanh.pop %v1565
  %v1567 = vmul.f32 %v1562, %v1566
  %s1568 = scalar_lea.vmem %s2, 32
  %1569 = vst [vmem:[%s1568] sm:$0xff] %v1567
  %s1570 = scalar_lea.vmem %s0, 160
  %v1571 = vld [vmem:[%s1570] sm:$0xff]
  %v1572 = vld [vmem:[%s1570 + $0x8] sm:$0xff]
  %v1573 = vld [vmem:[%s1570 + $0x10] sm:$0xff]
  %v1574 = vld [vmem:[%s1570 + $0x18] sm:$0xff]
  %v1575 = vpack.c.bf16 %v1567, %v1567
  %v1576 = vld [vmem:[%s1] sm:$0xff]
  %v1577 = vld [vmem:[%s1 + $0x8] sm:$0xff]
  %v1578 = vld [vmem:[%s1 + $0x10] sm:$0xff]
  %v1579 = vld [vmem:[%s1 + $0x18] sm:$0xff]
  %v1580 = vld [vmem:[%s1 + $0x20] sm:$0xff]
  %v1581 = vld [vmem:[%s1 + $0x28] sm:$0xff]
  %v1582 = vld [vmem:[%s1 + $0x30] sm:$0xff]
  %v1583 = vld [vmem:[%s1 + $0x38] sm:$0xff]
  %v1584 = vld [vmem:[%s1 + $0x40] sm:$0xff]
  %v1585 = vld [vmem:[%s1 + $0x48] sm:$0xff]
  %v1586 = vld [vmem:[%s1 + $0x50] sm:$0xff]
  %v1587 = vld [vmem:[%s1 + $0x58] sm:$0xff]
  %v1588 = vld [vmem:[%s1 + $0x60] sm:$0xff]
  %v1589 = vld [vmem:[%s1 + $0x68] sm:$0xff]
  %v1590 = vld [vmem:[%s1 + $0x70] sm:$0xff]
  %v1591 = vld [vmem:[%s1 + $0x78] sm:$0xff]
  %v1592 = vld [vmem:[%s1 + $0x80] sm:$0xff]
  %v1593 = vld [vmem:[%s1 + $0x88] sm:$0xff]
  %v1594 = vld [vmem:[%s1 + $0x90] sm:$0xff]
  %v1595 = vld [vmem:[%s1 + $0x98] sm:$0xff]
  %v1596 = vld [vmem:[%s1 + $0xa0] sm:$0xff]
  %v1597 = vld [vmem:[%s1 + $0xa8] sm:$0xff]
  %v1598 = vld [vmem:[%s1 + $0xb0] sm:$0xff]
  %v1599 = vld [vmem:[%s1 + $0xb8] sm:$0xff]
  %v1600 = vld [vmem:[%s1 + $0xc0] sm:$0xff]
  %v1601 = vld [vmem:[%s1 + $0xc8] sm:$0xff]
  %v1602 = vld [vmem:[%s1 + $0xd0] sm:$0xff]
  %v1603 = vld [vmem:[%s1 + $0xd8] sm:$0xff]
  %v1604 = vld [vmem:[%s1 + $0xe0] sm:$0xff]
  %v1605 = vld [vmem:[%s1 + $0xe8] sm:$0xff]
  %v1606 = vld [vmem:[%s1 + $0xf0] sm:$0xff]
  %v1607 = vld [vmem:[%s1 + $0xf8] sm:$0xff]
  %v1640 = vunpack.c.l.b16 %v1576
  %v1641 = vunpack.c.h.b16 %v1576
  %v1642 = vunpack.c.l.b16 %v1577
  %v1643 = vunpack.c.h.b16 %v1577
  %v1644 = vunpack.c.l.b16 %v1578
  %v1645 = vunpack.c.h.b16 %v1578
  %v1646 = vunpack.c.l.b16 %v1579
  %v1647 = vunpack.c.h.b16 %v1579
  %v1648 = vunpack.c.l.b16 %v1580
  %v1649 = vunpack.c.h.b16 %v1580
  %v1650 = vunpack.c.l.b16 %v1581
  %v1651 = vunpack.c.h.b16 %v1581
  %v1652 = vunpack.c.l.b16 %v1582
  %v1653 = vunpack.c.h.b16 %v1582
  %v1654 = vunpack.c.l.b16 %v1583
  %v1655 = vunpack.c.h.b16 %v1583
  %v1656 = vunpack.c.l.b16 %v1584
  %v1657 = vunpack.c.h.b16 %v1584
  %v1658 = vunpack.c.l.b16 %v1585
  %v1659 = vunpack.c.h.b16 %v1585
  %v1660 = vunpack.c.l.b16 %v1586
  %v1661 = vunpack.c.h.b16 %v1586
  %v1662 = vunpack.c.l.b16 %v1587
  %v1663 = vunpack.c.h.b16 %v1587
  %v1664 = vunpack.c.l.b16 %v1588
  %v1665 = vunpack.c.h.b16 %v1588
  %v1666 = vunpack.c.l.b16 %v1589
  %v1667 = vunpack.c.h.b16 %v1589
  %v1668 = vunpack.c.l.b16 %v1590
  %v1669 = vunpack.c.h.b16 %v1590
  %v1670 = vunpack.c.l.b16 %v1591
  %v1671 = vunpack.c.h.b16 %v1591
  %v1672 = vunpack.c.l.b16 %v1592
  %v1673 = vunpack.c.h.b16 %v1592
  %v1674 = vunpack.c.l.b16 %v1593
  %v1675 = vunpack.c.h.b16 %v1593
  %v1676 = vunpack.c.l.b16 %v1594
  %v1677 = vunpack.c.h.b16 %v1594
  %v1678 = vunpack.c.l.b16 %v1595
  %v1679 = vunpack.c.h.b16 %v1595
  %v1680 = vunpack.c.l.b16 %v1596
  %v1681 = vunpack.c.h.b16 %v1596
  %v1682 = vunpack.c.l.b16 %v1597
  %v1683 = vunpack.c.h.b16 %v1597
  %v1684 = vunpack.c.l.b16 %v1598
  %v1685 = vunpack.c.h.b16 %v1598
  %v1686 = vunpack.c.l.b16 %v1599
  %v1687 = vunpack.c.h.b16 %v1599
  %v1688 = vunpack.c.l.b16 %v1600
  %v1689 = vunpack.c.h.b16 %v1600
  %v1690 = vunpack.c.l.b16 %v1601
  %v1691 = vunpack.c.h.b16 %v1601
  %v1692 = vunpack.c.l.b16 %v1602
  %v1693 = vunpack.c.h.b16 %v1602
  %v1694 = vunpack.c.l.b16 %v1603
  %v1695 = vunpack.c.h.b16 %v1603
  %v1696 = vunpack.c.l.b16 %v1604
  %v1697 = vunpack.c.h.b16 %v1604
  %v1698 = vunpack.c.l.b16 %v1605
  %v1699 = vunpack.c.h.b16 %v1605
  %v1700 = vunpack.c.l.b16 %v1606
  %v1701 = vunpack.c.h.b16 %v1606
  %v1702 = vunpack.c.l.b16 %v1607
  %v1703 = vunpack.c.h.b16 %v1607
  %v1704 = vpack.c.b16 %v1644, %v1640
  %v1705 = vpack.c.b16 %v1645, %v1641
  %v1706 = vpack.c.b16 %v1646, %v1642
  %v1707 = vpack.c.b16 %v1647, %v1643
  %v1708 = vpack.c.b16 %v1652, %v1648
  %v1709 = vpack.c.b16 %v1653, %v1649
  %v1710 = vpack.c.b16 %v1654, %v1650
  %v1711 = vpack.c.b16 %v1655, %v1651
  %v1712 = vpack.c.b16 %v1660, %v1656
  %v1713 = vpack.c.b16 %v1661, %v1657
  %v1714 = vpack.c.b16 %v1662, %v1658
  %v1715 = vpack.c.b16 %v1663, %v1659
  %v1716 = vpack.c.b16 %v1668, %v1664
  %v1717 = vpack.c.b16 %v1669, %v1665
  %v1718 = vpack.c.b16 %v1670, %v1666
  %v1719 = vpack.c.b16 %v1671, %v1667
  %v1720 = vpack.c.b16 %v1676, %v1672
  %v1721 = vpack.c.b16 %v1677, %v1673
  %v1722 = vpack.c.b16 %v1678, %v1674
  %v1723 = vpack.c.b16 %v1679, %v1675
  %v1724 = vpack.c.b16 %v1684, %v1680
  %v1725 = vpack.c.b16 %v1685, %v1681
  %v1726 = vpack.c.b16 %v1686, %v1682
  %v1727 = vpack.c.b16 %v1687, %v1683
  %v1728 = vpack.c.b16 %v1692, %v1688
  %v1729 = vpack.c.b16 %v1693, %v1689
  %v1730 = vpack.c.b16 %v1694, %v1690
  %v1731 = vpack.c.b16 %v1695, %v1691
  %v1732 = vpack.c.b16 %v1700, %v1696
  %v1733 = vpack.c.b16 %v1701, %v1697
  %v1734 = vpack.c.b16 %v1702, %v1698
  %v1735 = vpack.c.b16 %v1703, %v1699
  %1768 = vmatprep.subr.bf16.mxu0 %v1705
  %1769 = vmatpush1.bf16.msra.mxu0 %v1704
  %1770 = vmatprep.subr.bf16.mxu0 %v1709
  %1771 = vmatpush1.bf16.msra.mxu0 %v1708
  %1772 = vmatprep.subr.bf16.mxu0 %v1713
  %1773 = vmatpush1.bf16.msra.mxu0 %v1712
  %1774 = vmatprep.subr.bf16.mxu0 %v1717
  %1775 = vmatpush1.bf16.msra.mxu0 %v1716
  %1776 = vmatprep.subr.bf16.mxu0 %v1721
  %1777 = vmatpush1.bf16.msra.mxu0 %v1720
  %1778 = vmatprep.subr.bf16.mxu0 %v1725
  %1779 = vmatpush1.bf16.msra.mxu0 %v1724
  %1780 = vmatprep.subr.bf16.mxu0 %v1729
  %1781 = vmatpush1.bf16.msra.mxu0 %v1728
  %1782 = vmatprep.subr.bf16.mxu0 %v1733
  %1783 = vmatpush1.bf16.msra.mxu0 %v1732
  %1784 = vmatprep.subr.bf16.mxu0 0
  %1785 = vmatpush1.bf16.msra.mxu0 0
  %1786 = vmatprep.subr.bf16.mxu0 0
  %1787 = vmatpush1.bf16.msra.mxu0 0
  %1788 = vmatprep.subr.bf16.mxu0 0
  %1789 = vmatpush1.bf16.msra.mxu0 0
  %1790 = vmatprep.subr.bf16.mxu0 0
  %1791 = vmatpush1.bf16.msra.mxu0 0
  %1792 = vmatprep.subr.bf16.mxu0 0
  %1793 = vmatpush1.bf16.msra.mxu0 0
  %1794 = vmatprep.subr.bf16.mxu0 0
  %1795 = vmatpush1.bf16.msra.mxu0 0
  %1796 = vmatprep.subr.bf16.mxu0 0
  %1797 = vmatpush1.bf16.msra.mxu0 0
  %1798 = vmatprep.subr.bf16.mxu0 0
  %1799 = vmatpush1.bf16.msra.mxu0 0
  %1800 = vmatprep.mubr.bf16.mxu0 0
  %1801 = vmatmul.mubr.bf16.gmra.mrb[0].mxu0 %v1575
  %v1802 = vpop.f32.mrb[0].mxu0
  %v1803 = vadd.f32 0.0, %v1802
  %v1804 = vpop.f32.mrb[0].mxu0
  %v1805 = vadd.f32 0.0, %v1804
  %v1806 = vpop.f32.mrb[0].mxu0
  %v1807 = vpop.f32.mrb[0].mxu0
  %1808 = vdwg.mxu0
  %1809 = vmatprep.subr.bf16.mxu0 %v1707
  %1810 = vmatpush1.bf16.msra.mxu0 %v1706
  %1811 = vmatprep.subr.bf16.mxu0 %v1711
  %1812 = vmatpush1.bf16.msra.mxu0 %v1710
  %1813 = vmatprep.subr.bf16.mxu0 %v1715
  %1814 = vmatpush1.bf16.msra.mxu0 %v1714
  %1815 = vmatprep.subr.bf16.mxu0 %v1719
  %1816 = vmatpush1.bf16.msra.mxu0 %v1718
  %1817 = vmatprep.subr.bf16.mxu0 %v1723
  %1818 = vmatpush1.bf16.msra.mxu0 %v1722
  %1819 = vmatprep.subr.bf16.mxu0 %v1727
  %1820 = vmatpush1.bf16.msra.mxu0 %v1726
  %1821 = vmatprep.subr.bf16.mxu0 %v1731
  %1822 = vmatpush1.bf16.msra.mxu0 %v1730
  %1823 = vmatprep.subr.bf16.mxu0 %v1735
  %1824 = vmatpush1.bf16.msra.mxu0 %v1734
  %1825 = vmatprep.subr.bf16.mxu0 0
  %1826 = vmatpush1.bf16.msra.mxu0 0
  %1827 = vmatprep.subr.bf16.mxu0 0
  %1828 = vmatpush1.bf16.msra.mxu0 0
  %1829 = vmatprep.subr.bf16.mxu0 0
  %1830 = vmatpush1.bf16.msra.mxu0 0
  %1831 = vmatprep.subr.bf16.mxu0 0
  %1832 = vmatpush1.bf16.msra.mxu0 0
  %1833 = vmatprep.subr.bf16.mxu0 0
  %1834 = vmatpush1.bf16.msra.mxu0 0
  %1835 = vmatprep.subr.bf16.mxu0 0
  %1836 = vmatpush1.bf16.msra.mxu0 0
  %1837 = vmatprep.subr.bf16.mxu0 0
  %1838 = vmatpush1.bf16.msra.mxu0 0
  %1839 = vmatprep.subr.bf16.mxu0 0
  %1840 = vmatpush1.bf16.msra.mxu0 0
  %1841 = vmatprep.mubr.bf16.mxu0 0
  %1842 = vmatmul.mubr.bf16.gmra.mrb[0].mxu0 %v1575
  %v1843 = vpop.f32.mrb[0].mxu0
  %v1844 = vadd.f32 0.0, %v1843
  %v1845 = vpop.f32.mrb[0].mxu0
  %v1846 = vadd.f32 0.0, %v1845
  %v1847 = vpop.f32.mrb[0].mxu0
  %v1848 = vpop.f32.mrb[0].mxu0
  %1849 = vdwg.mxu0
  %v1850 = vadd.f32 %v1571, %v1803
  %v1851 = vadd.f32 %v1572, %v1805
  %v1852 = vadd.f32 %v1573, %v1844
  %v1853 = vadd.f32 %v1574, %v1846
  %v1854 = vxor.u32 %v1850, 2147483648
  %v1855 = vmul.f32 %v1854, 1.442695
  %v1856 = vpow.pop %v1855
  %v1857 = vadd.f32 %v1856, 1.0
  %v1858 = vrcp.pop %v1857
  %v1859 = vmul.f32 1.0, %v1858
  %v1860 = vxor.u32 %v1851, 2147483648
  %v1861 = vmul.f32 %v1860, 1.442695
  %v1862 = vpow.pop %v1861
  %v1863 = vadd.f32 %v1862, 1.0
  %v1864 = vrcp.pop %v1863
  %v1865 = vmul.f32 1.0, %v1864
  %v1866 = vtanh.pop %v1852
  %v1867 = vxor.u32 %v1853, 2147483648
  %v1868 = vmul.f32 %v1867, 1.442695
  %v1869 = vpow.pop %v1868
  %v1870 = vadd.f32 %v1869, 1.0
  %v1871 = vrcp.pop %v1870
  %v1872 = vmul.f32 1.0, %v1871
  %v1873 = vmul.f32 %v1865, %v1565
  %v1874 = vmul.f32 %v1859, %v1866
  %v1875 = vadd.f32 %v1873, %v1874
  %v1876 = vtanh.pop %v1875
  %v1877 = vmul.f32 %v1872, %v1876
  %s1878 = scalar_lea.vmem %s2, 40
  %1879 = vst [vmem:[%s1878] sm:$0xff] %v1877
  %s1880 = scalar_lea.vmem %s0, 192
  %v1881 = vld [vmem:[%s1880] sm:$0xff]
  %v1882 = vld [vmem:[%s1880 + $0x8] sm:$0xff]
  %v1883 = vld [vmem:[%s1880 + $0x10] sm:$0xff]
  %v1884 = vld [vmem:[%s1880 + $0x18] sm:$0xff]
  %v1885 = vpack.c.bf16 %v1877, %v1877
  %v1886 = vld [vmem:[%s1] sm:$0xff]
  %v1887 = vld [vmem:[%s1 + $0x8] sm:$0xff]
  %v1888 = vld [vmem:[%s1 + $0x10] sm:$0xff]
  %v1889 = vld [vmem:[%s1 + $0x18] sm:$0xff]
  %v1890 = vld [vmem:[%s1 + $0x20] sm:$0xff]
  %v1891 = vld [vmem:[%s1 + $0x28] sm:$0xff]
  %v1892 = vld [vmem:[%s1 + $0x30] sm:$0xff]
  %v1893 = vld [vmem:[%s1 + $0x38] sm:$0xff]
  %v1894 = vld [vmem:[%s1 + $0x40] sm:$0xff]
  %v1895 = vld [vmem:[%s1 + $0x48] sm:$0xff]
  %v1896 = vld [vmem:[%s1 + $0x50] sm:$0xff]
  %v1897 = vld [vmem:[%s1 + $0x58] sm:$0xff]
  %v1898 = vld [vmem:[%s1 + $0x60] sm:$0xff]
  %v1899 = vld [vmem:[%s1 + $0x68] sm:$0xff]
  %v1900 = vld [vmem:[%s1 + $0x70] sm:$0xff]
  %v1901 = vld [vmem:[%s1 + $0x78] sm:$0xff]
  %v1902 = vld [vmem:[%s1 + $0x80] sm:$0xff]
  %v1903 = vld [vmem:[%s1 + $0x88] sm:$0xff]
  %v1904 = vld [vmem:[%s1 + $0x90] sm:$0xff]
  %v1905 = vld [vmem:[%s1 + $0x98] sm:$0xff]
  %v1906 = vld [vmem:[%s1 + $0xa0] sm:$0xff]
  %v1907 = vld [vmem:[%s1 + $0xa8] sm:$0xff]
  %v1908 = vld [vmem:[%s1 + $0xb0] sm:$0xff]
  %v1909 = vld [vmem:[%s1 + $0xb8] sm:$0xff]
  %v1910 = vld [vmem:[%s1 + $0xc0] sm:$0xff]
  %v1911 = vld [vmem:[%s1 + $0xc8] sm:$0xff]
  %v1912 = vld [vmem:[%s1 + $0xd0] sm:$0xff]
  %v1913 = vld [vmem:[%s1 + $0xd8] sm:$0xff]
  %v1914 = vld [vmem:[%s1 + $0xe0] sm:$0xff]
  %v1915 = vld [vmem:[%s1 + $0xe8] sm:$0xff]
  %v1916 = vld [vmem:[%s1 + $0xf0] sm:$0xff]
  %v1917 = vld [vmem:[%s1 + $0xf8] sm:$0xff]
  %v1950 = vunpack.c.l.b16 %v1886
  %v1951 = vunpack.c.h.b16 %v1886
  %v1952 = vunpack.c.l.b16 %v1887
  %v1953 = vunpack.c.h.b16 %v1887
  %v1954 = vunpack.c.l.b16 %v1888
  %v1955 = vunpack.c.h.b16 %v1888
  %v1956 = vunpack.c.l.b16 %v1889
  %v1957 = vunpack.c.h.b16 %v1889
  %v1958 = vunpack.c.l.b16 %v1890
  %v1959 = vunpack.c.h.b16 %v1890
  %v1960 = vunpack.c.l.b16 %v1891
  %v1961 = vunpack.c.h.b16 %v1891
  %v1962 = vunpack.c.l.b16 %v1892
  %v1963 = vunpack.c.h.b16 %v1892
  %v1964 = vunpack.c.l.b16 %v1893
  %v1965 = vunpack.c.h.b16 %v1893
  %v1966 = vunpack.c.l.b16 %v1894
  %v1967 = vunpack.c.h.b16 %v1894
  %v1968 = vunpack.c.l.b16 %v1895
  %v1969 = vunpack.c.h.b16 %v1895
  %v1970 = vunpack.c.l.b16 %v1896
  %v1971 = vunpack.c.h.b16 %v1896
  %v1972 = vunpack.c.l.b16 %v1897
  %v1973 = vunpack.c.h.b16 %v1897
  %v1974 = vunpack.c.l.b16 %v1898
  %v1975 = vunpack.c.h.b16 %v1898
  %v1976 = vunpack.c.l.b16 %v1899
  %v1977 = vunpack.c.h.b16 %v1899
  %v1978 = vunpack.c.l.b16 %v1900
  %v1979 = vunpack.c.h.b16 %v1900
  %v1980 = vunpack.c.l.b16 %v1901
  %v1981 = vunpack.c.h.b16 %v1901
  %v1982 = vunpack.c.l.b16 %v1902
  %v1983 = vunpack.c.h.b16 %v1902
  %v1984 = vunpack.c.l.b16 %v1903
  %v1985 = vunpack.c.h.b16 %v1903
  %v1986 = vunpack.c.l.b16 %v1904
  %v1987 = vunpack.c.h.b16 %v1904
  %v1988 = vunpack.c.l.b16 %v1905
  %v1989 = vunpack.c.h.b16 %v1905
  %v1990 = vunpack.c.l.b16 %v1906
  %v1991 = vunpack.c.h.b16 %v1906
  %v1992 = vunpack.c.l.b16 %v1907
  %v1993 = vunpack.c.h.b16 %v1907
  %v1994 = vunpack.c.l.b16 %v1908
  %v1995 = vunpack.c.h.b16 %v1908
  %v1996 = vunpack.c.l.b16 %v1909
  %v1997 = vunpack.c.h.b16 %v1909
  %v1998 = vunpack.c.l.b16 %v1910
  %v1999 = vunpack.c.h.b16 %v1910
  %v2000 = vunpack.c.l.b16 %v1911
  %v2001 = vunpack.c.h.b16 %v1911
  %v2002 = vunpack.c.l.b16 %v1912
  %v2003 = vunpack.c.h.b16 %v1912
  %v2004 = vunpack.c.l.b16 %v1913
  %v2005 = vunpack.c.h.b16 %v1913
  %v2006 = vunpack.c.l.b16 %v1914
  %v2007 = vunpack.c.h.b16 %v1914
  %v2008 = vunpack.c.l.b16 %v1915
  %v2009 = vunpack.c.h.b16 %v1915
  %v2010 = vunpack.c.l.b16 %v1916
  %v2011 = vunpack.c.h.b16 %v1916
  %v2012 = vunpack.c.l.b16 %v1917
  %v2013 = vunpack.c.h.b16 %v1917
  %v2014 = vpack.c.b16 %v1954, %v1950
  %v2015 = vpack.c.b16 %v1955, %v1951
  %v2016 = vpack.c.b16 %v1956, %v1952
  %v2017 = vpack.c.b16 %v1957, %v1953
  %v2018 = vpack.c.b16 %v1962, %v1958
  %v2019 = vpack.c.b16 %v1963, %v1959
  %v2020 = vpack.c.b16 %v1964, %v1960
  %v2021 = vpack.c.b16 %v1965, %v1961
  %v2022 = vpack.c.b16 %v1970, %v1966
  %v2023 = vpack.c.b16 %v1971, %v1967
  %v2024 = vpack.c.b16 %v1972, %v1968
  %v2025 = vpack.c.b16 %v1973, %v1969
  %v2026 = vpack.c.b16 %v1978, %v1974
  %v2027 = vpack.c.b16 %v1979, %v1975
  %v2028 = vpack.c.b16 %v1980, %v1976
  %v2029 = vpack.c.b16 %v1981, %v1977
  %v2030 = vpack.c.b16 %v1986, %v1982
  %v2031 = vpack.c.b16 %v1987, %v1983
  %v2032 = vpack.c.b16 %v1988, %v1984
  %v2033 = vpack.c.b16 %v1989, %v1985
  %v2034 = vpack.c.b16 %v1994, %v1990
  %v2035 = vpack.c.b16 %v1995, %v1991
  %v2036 = vpack.c.b16 %v1996, %v1992
  %v2037 = vpack.c.b16 %v1997, %v1993
  %v2038 = vpack.c.b16 %v2002, %v1998
  %v2039 = vpack.c.b16 %v2003, %v1999
  %v2040 = vpack.c.b16 %v2004, %v2000
  %v2041 = vpack.c.b16 %v2005, %v2001
  %v2042 = vpack.c.b16 %v2010, %v2006
  %v2043 = vpack.c.b16 %v2011, %v2007
  %v2044 = vpack.c.b16 %v2012, %v2008
  %v2045 = vpack.c.b16 %v2013, %v2009
  %2078 = vmatprep.subr.bf16.mxu0 %v2015
  %2079 = vmatpush1.bf16.msra.mxu0 %v2014
  %2080 = vmatprep.subr.bf16.mxu0 %v2019
  %2081 = vmatpush1.bf16.msra.mxu0 %v2018
  %2082 = vmatprep.subr.bf16.mxu0 %v2023
  %2083 = vmatpush1.bf16.msra.mxu0 %v2022
  %2084 = vmatprep.subr.bf16.mxu0 %v2027
  %2085 = vmatpush1.bf16.msra.mxu0 %v2026
  %2086 = vmatprep.subr.bf16.mxu0 %v2031
  %2087 = vmatpush1.bf16.msra.mxu0 %v2030
  %2088 = vmatprep.subr.bf16.mxu0 %v2035
  %2089 = vmatpush1.bf16.msra.mxu0 %v2034
  %2090 = vmatprep.subr.bf16.mxu0 %v2039
  %2091 = vmatpush1.bf16.msra.mxu0 %v2038
  %2092 = vmatprep.subr.bf16.mxu0 %v2043
  %2093 = vmatpush1.bf16.msra.mxu0 %v2042
  %2094 = vmatprep.subr.bf16.mxu0 0
  %2095 = vmatpush1.bf16.msra.mxu0 0
  %2096 = vmatprep.subr.bf16.mxu0 0
  %2097 = vmatpush1.bf16.msra.mxu0 0
  %2098 = vmatprep.subr.bf16.mxu0 0
  %2099 = vmatpush1.bf16.msra.mxu0 0
  %2100 = vmatprep.subr.bf16.mxu0 0
  %2101 = vmatpush1.bf16.msra.mxu0 0
  %2102 = vmatprep.subr.bf16.mxu0 0
  %2103 = vmatpush1.bf16.msra.mxu0 0
  %2104 = vmatprep.subr.bf16.mxu0 0
  %2105 = vmatpush1.bf16.msra.mxu0 0
  %2106 = vmatprep.subr.bf16.mxu0 0
  %2107 = vmatpush1.bf16.msra.mxu0 0
  %2108 = vmatprep.subr.bf16.mxu0 0
  %2109 = vmatpush1.bf16.msra.mxu0 0
  %2110 = vmatprep.mubr.bf16.mxu0 0
  %2111 = vmatmul.mubr.bf16.gmra.mrb[0].mxu0 %v1885
  %v2112 = vpop.f32.mrb[0].mxu0
  %v2113 = vadd.f32 0.0, %v2112
  %v2114 = vpop.f32.mrb[0].mxu0
  %v2115 = vadd.f32 0.0, %v2114
  %v2116 = vpop.f32.mrb[0].mxu0
  %v2117 = vpop.f32.mrb[0].mxu0
  %2118 = vdwg.mxu0
  %2119 = vmatprep.subr.bf16.mxu0 %v2017
  %2120 = vmatpush1.bf16.msra.mxu0 %v2016
  %2121 = vmatprep.subr.bf16.mxu0 %v2021
  %2122 = vmatpush1.bf16.msra.mxu0 %v2020
  %2123 = vmatprep.subr.bf16.mxu0 %v2025
  %2124 = vmatpush1.bf16.msra.mxu0 %v2024
  %2125 = vmatprep.subr.bf16.mxu0 %v2029
  %2126 = vmatpush1.bf16.msra.mxu0 %v2028
  %2127 = vmatprep.subr.bf16.mxu0 %v2033
  %2128 = vmatpush1.bf16.msra.mxu0 %v2032
  %2129 = vmatprep.subr.bf16.mxu0 %v2037
  %2130 = vmatpush1.bf16.msra.mxu0 %v2036
  %2131 = vmatprep.subr.bf16.mxu0 %v2041
  %2132 = vmatpush1.bf16.msra.mxu0 %v2040
  %2133 = vmatprep.subr.bf16.mxu0 %v2045
  %2134 = vmatpush1.bf16.msra.mxu0 %v2044
  %2135 = vmatprep.subr.bf16.mxu0 0
  %2136 = vmatpush1.bf16.msra.mxu0 0
  %2137 = vmatprep.subr.bf16.mxu0 0
  %2138 = vmatpush1.bf16.msra.mxu0 0
  %2139 = vmatprep.subr.bf16.mxu0 0
  %2140 = vmatpush1.bf16.msra.mxu0 0
  %2141 = vmatprep.subr.bf16.mxu0 0
  %2142 = vmatpush1.bf16.msra.mxu0 0
  %2143 = vmatprep.subr.bf16.mxu0 0
  %2144 = vmatpush1.bf16.msra.mxu0 0
  %2145 = vmatprep.subr.bf16.mxu0 0
  %2146 = vmatpush1.bf16.msra.mxu0 0
  %2147 = vmatprep.subr.bf16.mxu0 0
  %2148 = vmatpush1.bf16.msra.mxu0 0
  %2149 = vmatprep.subr.bf16.mxu0 0
  %2150 = vmatpush1.bf16.msra.mxu0 0
  %2151 = vmatprep.mubr.bf16.mxu0 0
  %2152 = vmatmul.mubr.bf16.gmra.mrb[0].mxu0 %v1885
  %v2153 = vpop.f32.mrb[0].mxu0
  %v2154 = vadd.f32 0.0, %v2153
  %v2155 = vpop.f32.mrb[0].mxu0
  %v2156 = vadd.f32 0.0, %v2155
  %v2157 = vpop.f32.mrb[0].mxu0
  %v2158 = vpop.f32.mrb[0].mxu0
  %2159 = vdwg.mxu0
  %v2160 = vadd.f32 %v1881, %v2113
  %v2161 = vadd.f32 %v1882, %v2115
  %v2162 = vadd.f32 %v1883, %v2154
  %v2163 = vadd.f32 %v1884, %v2156
  %v2164 = vxor.u32 %v2160, 2147483648
  %v2165 = vmul.f32 %v2164, 1.442695
  %v2166 = vpow.pop %v2165
  %v2167 = vadd.f32 %v2166, 1.0
  %v2168 = vrcp.pop %v2167
  %v2169 = vmul.f32 1.0, %v2168
  %v2170 = vxor.u32 %v2161, 2147483648
  %v2171 = vmul.f32 %v2170, 1.442695
  %v2172 = vpow.pop %v2171
  %v2173 = vadd.f32 %v2172, 1.0
  %v2174 = vrcp.pop %v2173
  %v2175 = vmul.f32 1.0, %v2174
  %v2176 = vtanh.pop %v2162
  %v2177 = vxor.u32 %v2163, 2147483648
  %v2178 = vmul.f32 %v2177, 1.442695
  %v2179 = vpow.pop %v2178
  %v2180 = vadd.f32 %v2179, 1.0
  %v2181 = vrcp.pop %v2180
  %v2182 = vmul.f32 1.0, %v2181
  %v2183 = vmul.f32 %v2175, %v1875
  %v2184 = vmul.f32 %v2169, %v2176
  %v2185 = vadd.f32 %v2183, %v2184
  %v2186 = vtanh.pop %v2185
  %v2187 = vmul.f32 %v2182, %v2186
  %s2188 = scalar_lea.vmem %s2, 48
  %2189 = vst [vmem:[%s2188] sm:$0xff] %v2187
  %s2190 = scalar_lea.vmem %s0, 224
  %v2191 = vld [vmem:[%s2190] sm:$0xff]
  %v2192 = vld [vmem:[%s2190 + $0x8] sm:$0xff]
  %v2193 = vld [vmem:[%s2190 + $0x10] sm:$0xff]
  %v2194 = vld [vmem:[%s2190 + $0x18] sm:$0xff]
  %v2195 = vpack.c.bf16 %v2187, %v2187
  %v2196 = vld [vmem:[%s1] sm:$0xff]
  %v2197 = vld [vmem:[%s1 + $0x8] sm:$0xff]
  %v2198 = vld [vmem:[%s1 + $0x10] sm:$0xff]
  %v2199 = vld [vmem:[%s1 + $0x18] sm:$0xff]
  %v2200 = vld [vmem:[%s1 + $0x20] sm:$0xff]
  %v2201 = vld [vmem:[%s1 + $0x28] sm:$0xff]
  %v2202 = vld [vmem:[%s1 + $0x30] sm:$0xff]
  %v2203 = vld [vmem:[%s1 + $0x38] sm:$0xff]
  %v2204 = vld [vmem:[%s1 + $0x40] sm:$0xff]
  %v2205 = vld [vmem:[%s1 + $0x48] sm:$0xff]
  %v2206 = vld [vmem:[%s1 + $0x50] sm:$0xff]
  %v2207 = vld [vmem:[%s1 + $0x58] sm:$0xff]
  %v2208 = vld [vmem:[%s1 + $0x60] sm:$0xff]
  %v2209 = vld [vmem:[%s1 + $0x68] sm:$0xff]
  %v2210 = vld [vmem:[%s1 + $0x70] sm:$0xff]
  %v2211 = vld [vmem:[%s1 + $0x78] sm:$0xff]
  %v2212 = vld [vmem:[%s1 + $0x80] sm:$0xff]
  %v2213 = vld [vmem:[%s1 + $0x88] sm:$0xff]
  %v2214 = vld [vmem:[%s1 + $0x90] sm:$0xff]
  %v2215 = vld [vmem:[%s1 + $0x98] sm:$0xff]
  %v2216 = vld [vmem:[%s1 + $0xa0] sm:$0xff]
  %v2217 = vld [vmem:[%s1 + $0xa8] sm:$0xff]
  %v2218 = vld [vmem:[%s1 + $0xb0] sm:$0xff]
  %v2219 = vld [vmem:[%s1 + $0xb8] sm:$0xff]
  %v2220 = vld [vmem:[%s1 + $0xc0] sm:$0xff]
  %v2221 = vld [vmem:[%s1 + $0xc8] sm:$0xff]
  %v2222 = vld [vmem:[%s1 + $0xd0] sm:$0xff]
  %v2223 = vld [vmem:[%s1 + $0xd8] sm:$0xff]
  %v2224 = vld [vmem:[%s1 + $0xe0] sm:$0xff]
  %v2225 = vld [vmem:[%s1 + $0xe8] sm:$0xff]
  %v2226 = vld [vmem:[%s1 + $0xf0] sm:$0xff]
  %v2227 = vld [vmem:[%s1 + $0xf8] sm:$0xff]
  %v2260 = vunpack.c.l.b16 %v2196
  %v2261 = vunpack.c.h.b16 %v2196
  %v2262 = vunpack.c.l.b16 %v2197
  %v2263 = vunpack.c.h.b16 %v2197
  %v2264 = vunpack.c.l.b16 %v2198
  %v2265 = vunpack.c.h.b16 %v2198
  %v2266 = vunpack.c.l.b16 %v2199
  %v2267 = vunpack.c.h.b16 %v2199
  %v2268 = vunpack.c.l.b16 %v2200
  %v2269 = vunpack.c.h.b16 %v2200
  %v2270 = vunpack.c.l.b16 %v2201
  %v2271 = vunpack.c.h.b16 %v2201
  %v2272 = vunpack.c.l.b16 %v2202
  %v2273 = vunpack.c.h.b16 %v2202
  %v2274 = vunpack.c.l.b16 %v2203
  %v2275 = vunpack.c.h.b16 %v2203
  %v2276 = vunpack.c.l.b16 %v2204
  %v2277 = vunpack.c.h.b16 %v2204
  %v2278 = vunpack.c.l.b16 %v2205
  %v2279 = vunpack.c.h.b16 %v2205
  %v2280 = vunpack.c.l.b16 %v2206
  %v2281 = vunpack.c.h.b16 %v2206
  %v2282 = vunpack.c.l.b16 %v2207
  %v2283 = vunpack.c.h.b16 %v2207
  %v2284 = vunpack.c.l.b16 %v2208
  %v2285 = vunpack.c.h.b16 %v2208
  %v2286 = vunpack.c.l.b16 %v2209
  %v2287 = vunpack.c.h.b16 %v2209
  %v2288 = vunpack.c.l.b16 %v2210
  %v2289 = vunpack.c.h.b16 %v2210
  %v2290 = vunpack.c.l.b16 %v2211
  %v2291 = vunpack.c.h.b16 %v2211
  %v2292 = vunpack.c.l.b16 %v2212
  %v2293 = vunpack.c.h.b16 %v2212
  %v2294 = vunpack.c.l.b16 %v2213
  %v2295 = vunpack.c.h.b16 %v2213
  %v2296 = vunpack.c.l.b16 %v2214
  %v2297 = vunpack.c.h.b16 %v2214
  %v2298 = vunpack.c.l.b16 %v2215
  %v2299 = vunpack.c.h.b16 %v2215
  %v2300 = vunpack.c.l.b16 %v2216
  %v2301 = vunpack.c.h.b16 %v2216
  %v2302 = vunpack.c.l.b16 %v2217
  %v2303 = vunpack.c.h.b16 %v2217
  %v2304 = vunpack.c.l.b16 %v2218
  %v2305 = vunpack.c.h.b16 %v2218
  %v2306 = vunpack.c.l.b16 %v2219
  %v2307 = vunpack.c.h.b16 %v2219
  %v2308 = vunpack.c.l.b16 %v2220
  %v2309 = vunpack.c.h.b16 %v2220
  %v2310 = vunpack.c.l.b16 %v2221
  %v2311 = vunpack.c.h.b16 %v2221
  %v2312 = vunpack.c.l.b16 %v2222
  %v2313 = vunpack.c.h.b16 %v2222
  %v2314 = vunpack.c.l.b16 %v2223
  %v2315 = vunpack.c.h.b16 %v2223
  %v2316 = vunpack.c.l.b16 %v2224
  %v2317 = vunpack.c.h.b16 %v2224
  %v2318 = vunpack.c.l.b16 %v2225
  %v2319 = vunpack.c.h.b16 %v2225
  %v2320 = vunpack.c.l.b16 %v2226
  %v2321 = vunpack.c.h.b16 %v2226
  %v2322 = vunpack.c.l.b16 %v2227
  %v2323 = vunpack.c.h.b16 %v2227
  %v2324 = vpack.c.b16 %v2264, %v2260
  %v2325 = vpack.c.b16 %v2265, %v2261
  %v2326 = vpack.c.b16 %v2266, %v2262
  %v2327 = vpack.c.b16 %v2267, %v2263
  %v2328 = vpack.c.b16 %v2272, %v2268
  %v2329 = vpack.c.b16 %v2273, %v2269
  %v2330 = vpack.c.b16 %v2274, %v2270
  %v2331 = vpack.c.b16 %v2275, %v2271
  %v2332 = vpack.c.b16 %v2280, %v2276
  %v2333 = vpack.c.b16 %v2281, %v2277
  %v2334 = vpack.c.b16 %v2282, %v2278
  %v2335 = vpack.c.b16 %v2283, %v2279
  %v2336 = vpack.c.b16 %v2288, %v2284
  %v2337 = vpack.c.b16 %v2289, %v2285
  %v2338 = vpack.c.b16 %v2290, %v2286
  %v2339 = vpack.c.b16 %v2291, %v2287
  %v2340 = vpack.c.b16 %v2296, %v2292
  %v2341 = vpack.c.b16 %v2297, %v2293
  %v2342 = vpack.c.b16 %v2298, %v2294
  %v2343 = vpack.c.b16 %v2299, %v2295
  %v2344 = vpack.c.b16 %v2304, %v2300
  %v2345 = vpack.c.b16 %v2305, %v2301
  %v2346 = vpack.c.b16 %v2306, %v2302
  %v2347 = vpack.c.b16 %v2307, %v2303
  %v2348 = vpack.c.b16 %v2312, %v2308
  %v2349 = vpack.c.b16 %v2313, %v2309
  %v2350 = vpack.c.b16 %v2314, %v2310
  %v2351 = vpack.c.b16 %v2315, %v2311
  %v2352 = vpack.c.b16 %v2320, %v2316
  %v2353 = vpack.c.b16 %v2321, %v2317
  %v2354 = vpack.c.b16 %v2322, %v2318
  %v2355 = vpack.c.b16 %v2323, %v2319
  %2388 = vmatprep.subr.bf16.mxu0 %v2325
  %2389 = vmatpush1.bf16.msra.mxu0 %v2324
  %2390 = vmatprep.subr.bf16.mxu0 %v2329
  %2391 = vmatpush1.bf16.msra.mxu0 %v2328
  %2392 = vmatprep.subr.bf16.mxu0 %v2333
  %2393 = vmatpush1.bf16.msra.mxu0 %v2332
  %2394 = vmatprep.subr.bf16.mxu0 %v2337
  %2395 = vmatpush1.bf16.msra.mxu0 %v2336
  %2396 = vmatprep.subr.bf16.mxu0 %v2341
  %2397 = vmatpush1.bf16.msra.mxu0 %v2340
  %2398 = vmatprep.subr.bf16.mxu0 %v2345
  %2399 = vmatpush1.bf16.msra.mxu0 %v2344
  %2400 = vmatprep.subr.bf16.mxu0 %v2349
  %2401 = vmatpush1.bf16.msra.mxu0 %v2348
  %2402 = vmatprep.subr.bf16.mxu0 %v2353
  %2403 = vmatpush1.bf16.msra.mxu0 %v2352
  %2404 = vmatprep.subr.bf16.mxu0 0
  %2405 = vmatpush1.bf16.msra.mxu0 0
  %2406 = vmatprep.subr.bf16.mxu0 0
  %2407 = vmatpush1.bf16.msra.mxu0 0
  %2408 = vmatprep.subr.bf16.mxu0 0
  %2409 = vmatpush1.bf16.msra.mxu0 0
  %2410 = vmatprep.subr.bf16.mxu0 0
  %2411 = vmatpush1.bf16.msra.mxu0 0
  %2412 = vmatprep.subr.bf16.mxu0 0
  %2413 = vmatpush1.bf16.msra.mxu0 0
  %2414 = vmatprep.subr.bf16.mxu0 0
  %2415 = vmatpush1.bf16.msra.mxu0 0
  %2416 = vmatprep.subr.bf16.mxu0 0
  %2417 = vmatpush1.bf16.msra.mxu0 0
  %2418 = vmatprep.subr.bf16.mxu0 0
  %2419 = vmatpush1.bf16.msra.mxu0 0
  %2420 = vmatprep.mubr.bf16.mxu0 0
  %2421 = vmatmul.mubr.bf16.gmra.mrb[0].mxu0 %v2195
  %v2422 = vpop.f32.mrb[0].mxu0
  %v2423 = vadd.f32 0.0, %v2422
  %v2424 = vpop.f32.mrb[0].mxu0
  %v2425 = vadd.f32 0.0, %v2424
  %v2426 = vpop.f32.mrb[0].mxu0
  %v2427 = vpop.f32.mrb[0].mxu0
  %2428 = vdwg.mxu0
  %2429 = vmatprep.subr.bf16.mxu0 %v2327
  %2430 = vmatpush1.bf16.msra.mxu0 %v2326
  %2431 = vmatprep.subr.bf16.mxu0 %v2331
  %2432 = vmatpush1.bf16.msra.mxu0 %v2330
  %2433 = vmatprep.subr.bf16.mxu0 %v2335
  %2434 = vmatpush1.bf16.msra.mxu0 %v2334
  %2435 = vmatprep.subr.bf16.mxu0 %v2339
  %2436 = vmatpush1.bf16.msra.mxu0 %v2338
  %2437 = vmatprep.subr.bf16.mxu0 %v2343
  %2438 = vmatpush1.bf16.msra.mxu0 %v2342
  %2439 = vmatprep.subr.bf16.mxu0 %v2347
  %2440 = vmatpush1.bf16.msra.mxu0 %v2346
  %2441 = vmatprep.subr.bf16.mxu0 %v2351
  %2442 = vmatpush1.bf16.msra.mxu0 %v2350
  %2443 = vmatprep.subr.bf16.mxu0 %v2355
  %2444 = vmatpush1.bf16.msra.mxu0 %v2354
  %2445 = vmatprep.subr.bf16.mxu0 0
  %2446 = vmatpush1.bf16.msra.mxu0 0
  %2447 = vmatprep.subr.bf16.mxu0 0
  %2448 = vmatpush1.bf16.msra.mxu0 0
  %2449 = vmatprep.subr.bf16.mxu0 0
  %2450 = vmatpush1.bf16.msra.mxu0 0
  %2451 = vmatprep.subr.bf16.mxu0 0
  %2452 = vmatpush1.bf16.msra.mxu0 0
  %2453 = vmatprep.subr.bf16.mxu0 0
  %2454 = vmatpush1.bf16.msra.mxu0 0
  %2455 = vmatprep.subr.bf16.mxu0 0
  %2456 = vmatpush1.bf16.msra.mxu0 0
  %2457 = vmatprep.subr.bf16.mxu0 0
  %2458 = vmatpush1.bf16.msra.mxu0 0
  %2459 = vmatprep.subr.bf16.mxu0 0
  %2460 = vmatpush1.bf16.msra.mxu0 0
  %2461 = vmatprep.mubr.bf16.mxu0 0
  %2462 = vmatmul.mubr.bf16.gmra.mrb[0].mxu0 %v2195
  %v2463 = vpop.f32.mrb[0].mxu0
  %v2464 = vadd.f32 0.0, %v2463
  %v2465 = vpop.f32.mrb[0].mxu0
  %v2466 = vadd.f32 0.0, %v2465
  %v2467 = vpop.f32.mrb[0].mxu0
  %v2468 = vpop.f32.mrb[0].mxu0
  %2469 = vdwg.mxu0
  %v2470 = vadd.f32 %v2191, %v2423
  %v2471 = vadd.f32 %v2192, %v2425
  %v2472 = vadd.f32 %v2193, %v2464
  %v2473 = vadd.f32 %v2194, %v2466
  %v2474 = vxor.u32 %v2470, 2147483648
  %v2475 = vmul.f32 %v2474, 1.442695
  %v2476 = vpow.pop %v2475
  %v2477 = vadd.f32 %v2476, 1.0
  %v2478 = vrcp.pop %v2477
  %v2479 = vmul.f32 1.0, %v2478
  %v2480 = vxor.u32 %v2471, 2147483648
  %v2481 = vmul.f32 %v2480, 1.442695
  %v2482 = vpow.pop %v2481
  %v2483 = vadd.f32 %v2482, 1.0
  %v2484 = vrcp.pop %v2483
  %v2485 = vmul.f32 1.0, %v2484
  %v2486 = vtanh.pop %v2472
  %v2487 = vxor.u32 %v2473, 2147483648
  %v2488 = vmul.f32 %v2487, 1.442695
  %v2489 = vpow.pop %v2488
  %v2490 = vadd.f32 %v2489, 1.0
  %v2491 = vrcp.pop %v2490
  %v2492 = vmul.f32 1.0, %v2491
  %v2493 = vmul.f32 %v2485, %v2185
  %v2494 = vmul.f32 %v2479, %v2486
  %v2495 = vadd.f32 %v2493, %v2494
  %v2496 = vtanh.pop %v2495
  %v2497 = vmul.f32 %v2492, %v2496
  %s2498 = scalar_lea.vmem %s2, 56
  %2499 = vst [vmem:[%s2498] sm:$0xff] %v2497
  %2500 = vst [vmem:[#allocation2] sm:$0xff] %v2497
  %2501 = vst [vmem:[#allocation3] sm:$0xff] %v2495
  // Predicated region
  $region14: #{rnn_encoder_forward.1} parent=0 // pred_check
    %p2502 = pneg %p14
  $region15: #{rnn_encoder_forward.1} parent=0 // pred_check_branch
    %2504 = sbr.rel (%p2502) target = $region17
  $region16: #{rnn_encoder_forward.1} parent=0 // pred_region
    %2505 = vst [vmem:[%s3] sm:$0xff] %v2495
  $region17: #{rnn_encoder_forward.1} parent=0 // pred_fallthru
    _
  // Predicated region
  $region18: #{rnn_encoder_forward.1} parent=0 // pred_check
    _
  $region19: #{rnn_encoder_forward.1} parent=0 // pred_check_branch
    %2507 = sbr.rel (0) target = $region21
  $region20: #{rnn_encoder_forward.1} parent=0 // pred_region
    _
  $region21: #{rnn_encoder_forward.1} parent=0 // pred_fallthru
    _
  // Predicated region
  $region22: #{rnn_encoder_forward.1} parent=0 // pred_check
    _
  $region23: #{rnn_encoder_forward.1} parent=0 // pred_check_branch
    %2509 = sbr.rel (0) target = $region25
  $region24: #{rnn_encoder_forward.1} parent=0 // pred_region
    _
  $region25: #{rnn_encoder_forward.1} parent=0 // pred_fallthru
    _
  // Predicated region
  $region26: #{rnn_encoder_forward.1} parent=0 // pred_check
    _
  $region27: #{rnn_encoder_forward.1} parent=0 // pred_check_branch
    %2511 = sbr.rel (0) target = $region29
  $region28: #{rnn_encoder_forward.1} parent=0 // pred_region
    _
  $region29: #{rnn_encoder_forward.1} parent=0 // pred_fallthru
    _
  // Predicated region
  $region30: #{rnn_encoder_forward.1} parent=0 // pred_check
    _
  $region31: #{rnn_encoder_forward.1} parent=0 // pred_check_branch
    %2513 = sbr.rel (0) target = $region33
  $region32: #{rnn_encoder_forward.1} parent=0 // pred_region
    _
  $region33: #{rnn_encoder_forward.1} parent=0 // pred_fallthru
    _

</llo_original>
